<compile_context>
chip_gen: v6e
topology: v6e:2x2x1
jax: 0.10.0
libtpu: 0.0.40
codegen_flags: <defaults>
</compile_context>

<pallas_src>
import functools

import jax
import jax.numpy as jnp
from jax.experimental import pallas as pl
from jax.experimental.pallas import tpu as pltpu

EPS = 1e-5  # PyTorch nn.LayerNorm default eps
_SQRT1_2 = 0.7071067811865476


# ----------------------------- math helpers --------------------------------
def _layernorm(x, g, b):
    mu = jnp.mean(x, axis=-1, keepdims=True)
    var = jnp.mean(jnp.square(x - mu), axis=-1, keepdims=True)
    return (x - mu) * jax.lax.rsqrt(var + EPS) * g + b


def _erf_approx(x):
    # Abramowitz & Stegun 7.1.26 (max abs err ~1.5e-7 with exact division).
    # The divide is routed to the EUP via pl.reciprocal(approx=True).
    a1, a2, a3, a4, a5 = 0.254829592, -0.284496736, 1.421413741, -1.453152027, 1.061405429
    p = 0.3275911
    s = jnp.where(x < 0.0, -1.0, 1.0)
    ax = jnp.abs(x)
    t = pl.reciprocal(1.0 + p * ax, approx=True)
    poly = ((((a5 * t + a4) * t + a3) * t + a2) * t + a1) * t
    return s * (1.0 - poly * jnp.exp(-ax * ax))


def _gelu_kernel(x):
    # exact (erf-based) GELU, matching nn.GELU() default
    return 0.5 * x * (1.0 + _erf_approx(x * _SQRT1_2))


# ------------------------------- the kernel --------------------------------
def _mixer_kernel(depth, patches_ref, pe_w_ref, tw1t_ref, tw2t_ref,
                  cw1_ref, cw2_ref, head_w_ref, tb1_ref, tb2_ref,
                  vecs_ref, out_ref):
    D = pe_w_ref.shape[1]
    td4, N = tw1t_ref.shape[1], tw1t_ref.shape[2]
    cd4 = cw1_ref.shape[2]
    NCP = head_w_ref.shape[1]
    BB = out_ref.shape[0]              # images per block

    def vrow(r, w):
        # one packed (1, w) f32 row vector (LayerNorm gamma/beta or row bias)
        return vecs_ref[r:r + 1, :w]

    def mm(a, b):
        # single-pass bf16 MXU matmul with f32 accumulation
        return jnp.dot(a.astype(jnp.bfloat16), b.astype(jnp.bfloat16),
                       preferred_element_type=jnp.float32)

    # patch embedding over the whole block: M = BB*N
    x = mm(patches_ref[...], pe_w_ref[...]) + vrow(0, D)          # (BB*N, D) f32

    for l in range(depth):                                        # static; depth is small
        base = 1 + 6 * l

        # ---- token mixing: LN -> FF over num_patch (per image) -----------
        y = _layernorm(x, vrow(base, D), vrow(base + 1, D))       # (BB*N, D)
        w1t = tw1t_ref[l]                                         # (td4, N)  = W1^T
        w2t = tw2t_ref[l]                                         # (N, td4)  = W2^T
        b1c = tb1_ref[l]                                          # (td4, 1)
        b2c = tb2_ref[l]                                          # (N, 1)
        upds = []
        for b in range(BB):                                       # plain matmuls, no transposes
            yb = y[b * N:(b + 1) * N, :]                          # (N, D)
            hb = _gelu_kernel(mm(w1t, yb) + b1c)                  # (td4, D)
            upds.append(mm(w2t, hb) + b2c)                        # (N, D)
        upd = upds[0] if BB == 1 else jnp.concatenate(upds, axis=0)
        x = x + 2.0 * upd                                         # net1 + net2 (identical)

        # ---- channel mixing: LN -> FF over dim (whole block, M = BB*N) ---
        y = _layernorm(x, vrow(base + 2, D), vrow(base + 3, D))
        h = _gelu_kernel(mm(y, cw1_ref[l]) + vrow(base + 4, cd4)) # (BB*N, cd4)
        x = x + 2.0 * (mm(h, cw2_ref[l]) + vrow(base + 5, D))     # (BB*N, D)

    fbase = 1 + 6 * depth
    x = _layernorm(x, vrow(fbase, D), vrow(fbase + 1, D))

    if BB == 1:
        pooled = jnp.mean(x, axis=0, keepdims=True)               # (1, D)
    else:
        pooled = jnp.concatenate(
            [jnp.mean(x[b * N:(b + 1) * N, :], axis=0, keepdims=True)
             for b in range(BB)], axis=0)                         # (BB, D)

    # lane-dense padded logits slab (unmasked store)
    out_ref[...] = mm(pooled, head_w_ref[...]) + vrow(fbase + 2, NCP)


# ------------------------------ glue / wrapper ------------------------------
def extract_patches(x_nchw, p):
    """NCHW image -> (B, N, C*p*p), flattening order (c, kh, kw)."""
    B, C, H, W = x_nchw.shape
    Hn, Wn = H // p, W // p
    x = x_nchw.reshape(B, C, Hn, p, Wn, p)
    x = x.transpose(0, 2, 4, 1, 3, 5)                     # B, Hn, Wn, C, p, p
    return x.reshape(B, Hn * Wn, C * p * p)


def pack_kernel_params(flat_params, depth, num_classes):
    """Pack the per-module params into a few slabs for the kernel."""
    it = iter(flat_params)
    nxt = lambda: next(it)
    bf = lambda a: a.astype(jnp.bfloat16)

    pe_w, pe_b = nxt(), nxt()
    tw1t, tw2t, cw1, cw2, tb1, tb2 = [], [], [], [], [], []
    vec_rows = [pe_b]
    for _ in range(depth):
        ln1_g, ln1_b = nxt(), nxt()
        t_w1, t_b1, t_w2, t_b2 = nxt(), nxt(), nxt(), nxt()
        ln2_g, ln2_b = nxt(), nxt()
        c_w1, c_b1, c_w2, c_b2 = nxt(), nxt(), nxt(), nxt()
        tw1t.append(t_w1.T)            # (td4, N): pre-transposed -> plain matmul in-kernel
        tw2t.append(t_w2.T)            # (N, td4)
        cw1.append(c_w1)               # (D, cd4)
        cw2.append(c_w2)               # (cd4, D)
        tb1.append(t_b1.T)             # (td4, 1) column bias
        tb2.append(t_b2.T)             # (N, 1)   column bias
        vec_rows += [ln1_g, ln1_b, ln2_g, ln2_b, c_b1, c_b2]
    lnf_g, lnf_b = nxt(), nxt()
    head_w, head_b = nxt(), nxt()

    ncp = -(-num_classes // 128) * 128                    # lane-dense logit width
    head_w_p = jnp.pad(head_w, ((0, 0), (0, ncp - num_classes)))
    head_b_p = jnp.pad(head_b, ((0, 0), (0, ncp - num_classes)))
    vec_rows += [lnf_g, lnf_b, head_b_p]

    vmax = max(max(r.shape[1] for r in vec_rows), 128)
    vecs = jnp.concatenate(
        [jnp.pad(r, ((0, 0), (0, vmax - r.shape[1]))) for r in vec_rows],
        axis=0).astype(jnp.float32)

    packed = (bf(pe_w),
              bf(jnp.stack(tw1t)), bf(jnp.stack(tw2t)),
              bf(jnp.stack(cw1)), bf(jnp.stack(cw2)),
              bf(head_w_p),
              jnp.stack(tb1).astype(jnp.float32),
              jnp.stack(tb2).astype(jnp.float32),
              vecs)
    return packed, ncp


def mlp_mixer2_forward(x_nchw, flat_params, patch_size, depth, num_classes,
                       block_batch=8):
    patches = extract_patches(x_nchw, patch_size)         # (B, N, CPP) f32
    B, N, CPP = patches.shape

    BB = min(B, block_batch)
    num_blocks = -(-B // BB)
    Bp = num_blocks * BB
    if Bp != B:
        patches = jnp.concatenate(
            [patches, jnp.zeros((Bp - B, N, CPP), patches.dtype)], axis=0)
    patches2d = patches.reshape(Bp * N, CPP).astype(jnp.bfloat16)

    (pe_w, tw1t, tw2t, cw1, cw2, head_w, tb1, tb2, vecs), NCP = \
        pack_kernel_params(flat_params, depth, num_classes)

    BBN = BB * N

    def full(a):
        return pl.BlockSpec(a.shape, lambda i, n=a.ndim: (0,) * n)

    in_specs = [
        pl.BlockSpec((BBN, CPP), lambda i: (i, 0)),       # patches (batch block)
        full(pe_w), full(tw1t), full(tw2t), full(cw1), full(cw2),
        full(head_w), full(tb1), full(tb2), full(vecs),
    ]
    out_specs = pl.BlockSpec((BB, NCP), lambda i: (i, 0))

    out = pl.pallas_call(
        functools.partial(_mixer_kernel, depth),
        out_shape=jax.ShapeDtypeStruct((Bp, NCP), jnp.float32),
        grid_spec=pltpu.PrefetchScalarGridSpec(
            num_scalar_prefetch=0,
            grid=(num_blocks,),
            in_specs=in_specs,
            out_specs=out_specs,
        ),
        compiler_params=pltpu.CompilerParams(
            dimension_semantics=("parallel",)),           # megacore-shardable on v7x
    )(patches2d, pe_w, tw1t, tw2t, cw1, cw2, head_w, tb1, tb2, vecs)

    return out[:B, :num_classes]


# ------------------------------ params (synthetic) --------------------------
def init_params(key, in_channels, dim, num_classes, patch_size, image_size,
                depth, token_dim, channel_dim):
    N = (image_size // patch_size) ** 2
    CPP = in_channels * patch_size * patch_size
    td4 = token_dim // 4
    cd4 = channel_dim // 4

    keys = iter(jax.random.split(key, 4 + depth * 8))

    def w(shape, scale=0.05):
        return (scale * jax.random.normal(next(keys), shape)).astype(jnp.float32)

    ones = lambda d: jnp.ones((1, d), jnp.float32)
    zeros = lambda d: jnp.zeros((1, d), jnp.float32)

    flat = [w((CPP, dim)), w((1, dim))]                   # patch embed W, b
    for _ in range(depth):
        flat += [ones(dim), zeros(dim)]                   # token-mix LayerNorm
        flat += [w((N, td4)), w((1, td4)), w((td4, N)), w((1, N))]        # FF over patches
        flat += [ones(dim), zeros(dim)]                   # channel-mix LayerNorm
        flat += [w((dim, cd4)), w((1, cd4)), w((cd4, dim)), w((1, dim))]  # FF over dim
    flat += [ones(dim), zeros(dim)]                       # final LayerNorm
    flat += [w((dim, num_classes)), w((1, num_classes))]  # mlp_head
    return flat


# ------------------------------ pure-JAX reference ---------------------------
def reference_forward(x_nchw, flat_params, patch_size, depth):
    bf16 = jnp.bfloat16

    def bdot(eq, a, b):
        # same numerics as the kernel: bf16 operands, f32 accumulation
        return jnp.einsum(eq, a.astype(bf16), b.astype(bf16),
                          preferred_element_type=jnp.float32)

    patches = extract_patches(x_nchw, patch_size)
    it = iter(flat_params)
    nxt = lambda: next(it)

    pe_w, pe_b = nxt(), nxt()
    z = bdot('bnc,cd->bnd', patches, pe_w) + pe_b
    for _ in range(depth):
        ln1_g, ln1_b = nxt(), nxt()
        t_w1, t_b1, t_w2, t_b2 = nxt(), nxt(), nxt(), nxt()
        ln2_g, ln2_b = nxt(), nxt()
        c_w1, c_b1, c_w2, c_b2 = nxt(), nxt(), nxt(), nxt()

        y = _layernorm(z, ln1_g, ln1_b)
        yt = jnp.swapaxes(y, 1, 2)
        h = jax.nn.gelu(bdot('bdn,nk->bdk', yt, t_w1) + t_b1, approximate=False)
        t = bdot('bdk,kn->bdn', h, t_w2) + t_b2
        z = z + 2.0 * jnp.swapaxes(t, 1, 2)

        y = _layernorm(z, ln2_g, ln2_b)
        h = jax.nn.gelu(bdot('bnd,dk->bnk', y, c_w1) + c_b1, approximate=False)
        z = z + 2.0 * (bdot('bnk,kd->bnd', h, c_w2) + c_b2)

    lnf_g, lnf_b = nxt(), nxt()
    head_w, head_b = nxt(), nxt()
    z = _layernorm(z, lnf_g, lnf_b)
    pooled = jnp.mean(z, axis=1)
    return bdot('bd,dc->bc', pooled, head_w) + head_b


# ----------------------------------- main ------------------------------------
if __name__ == "__main__":
    in_channels, dim, num_classes = 3, 32, 10
    patch_size, image_size, depth = 4, 16, 2
    token_dim, channel_dim = 32, 64
    B = 2

    key = jax.random.PRNGKey(0)
    kx, kp = jax.random.split(key)
    x = jax.random.normal(kx, (B, in_channels, image_size, image_size), jnp.float32)
    flat = init_params(kp, in_channels, dim, num_classes, patch_size, image_size,
                       depth, token_dim, channel_dim)

    out = mlp_mixer2_forward(x, flat, patch_size, depth, num_classes)
    out = jax.block_until_ready(out)

    ref = jax.block_until_ready(reference_forward(x, flat, patch_size, depth))
    assert out.shape == (B, num_classes), out.shape
    assert jnp.allclose(out, ref, rtol=5e-3, atol=5e-3), (out, ref)
    print("KERNEL_OK")
</pallas_src>

<mosaic_0001>
module attributes {stable_mosaic.version = 11 : i64} {
  func.func @_mixer_kernel(%arg0: i32, %arg1: memref<32x48xbf16, #tpu.memory_space<vmem>>, %arg2: memref<48x32xbf16, #tpu.memory_space<vmem>>, %arg3: memref<2x8x16xbf16, #tpu.memory_space<vmem>>, %arg4: memref<2x16x8xbf16, #tpu.memory_space<vmem>>, %arg5: memref<2x32x16xbf16, #tpu.memory_space<vmem>>, %arg6: memref<2x16x32xbf16, #tpu.memory_space<vmem>>, %arg7: memref<32x128xbf16, #tpu.memory_space<vmem>>, %arg8: memref<2x8x1xf32, #tpu.memory_space<vmem>>, %arg9: memref<2x16x1xf32, #tpu.memory_space<vmem>>, %arg10: memref<16x128xf32, #tpu.memory_space<vmem>>, %arg11: memref<2x128xf32, #tpu.memory_space<vmem>>) attributes {dimension_semantics = [#tpu.dimension_semantics<parallel>], iteration_bounds = array<i64: 1>, scalar_prefetch = 0 : i64, scratch_operands = 0 : i64, tpu.core_type = #tpu.core_type<tc>, window_params = [{transform_indices = @transform_0, window_bounds = array<i64: 32, 48>}, {pipeline_mode = #tpu.pipeline_mode<synchronous>, transform_indices = @transform_1, window_bounds = array<i64: 48, 32>}, {pipeline_mode = #tpu.pipeline_mode<synchronous>, transform_indices = @transform_2, window_bounds = array<i64: 2, 8, 16>}, {pipeline_mode = #tpu.pipeline_mode<synchronous>, transform_indices = @transform_3, window_bounds = array<i64: 2, 16, 8>}, {pipeline_mode = #tpu.pipeline_mode<synchronous>, transform_indices = @transform_4, window_bounds = array<i64: 2, 32, 16>}, {pipeline_mode = #tpu.pipeline_mode<synchronous>, transform_indices = @transform_5, window_bounds = array<i64: 2, 16, 32>}, {pipeline_mode = #tpu.pipeline_mode<synchronous>, transform_indices = @transform_6, window_bounds = array<i64: 32, 128>}, {pipeline_mode = #tpu.pipeline_mode<synchronous>, transform_indices = @transform_7, window_bounds = array<i64: 2, 8, 1>}, {pipeline_mode = #tpu.pipeline_mode<synchronous>, transform_indices = @transform_8, window_bounds = array<i64: 2, 16, 1>}, {pipeline_mode = #tpu.pipeline_mode<synchronous>, transform_indices = @transform_9, window_bounds = array<i64: 16, 128>}, {transform_indices = @transform_10, window_bounds = array<i64: 2, 128>}]} {
    %c0 = arith.constant 0 : index
    %c0_0 = arith.constant 0 : index
    %0 = vector.load %arg1[%c0, %c0_0] : memref<32x48xbf16, #tpu.memory_space<vmem>>, vector<32x48xbf16>
    %c0_1 = arith.constant 0 : index
    %c0_2 = arith.constant 0 : index
    %1 = vector.load %arg2[%c0_1, %c0_2] : memref<48x32xbf16, #tpu.memory_space<vmem>>, vector<48x32xbf16>
    %cst = arith.constant dense<0.000000e+00> : vector<32x32xf32>
    %2 = tpu.matmul %0, %1, %cst {dimension_numbers = #tpu.dot_dimension_numbers<[1], [0], [0], [1], [0, 0, 1, 1], [], []>} : vector<32x48xbf16>, vector<48x32xbf16>, vector<32x32xf32> -> vector<32x32xf32>
    %c0_3 = arith.constant 0 : index
    %c0_4 = arith.constant 0 : index
    %3 = vector.load %arg10[%c0_3, %c0_4] : memref<16x128xf32, #tpu.memory_space<vmem>>, vector<1x32xf32>
    %4 = vector.broadcast %3 : vector<1x32xf32> to vector<32x32xf32>
    %5 = arith.addf %2, %4 : vector<32x32xf32>
    %c1 = arith.constant 1 : index
    %c0_5 = arith.constant 0 : index
    %6 = vector.load %arg10[%c1, %c0_5] : memref<16x128xf32, #tpu.memory_space<vmem>>, vector<1x32xf32>
    %c2 = arith.constant 2 : index
    %c0_6 = arith.constant 0 : index
    %7 = vector.load %arg10[%c2, %c0_6] : memref<16x128xf32, #tpu.memory_space<vmem>>, vector<1x32xf32>
    %cst_7 = arith.constant dense<0.000000e+00> : vector<32xf32>
    %8 = vector.multi_reduction <add>, %5, %cst_7 [1] : vector<32x32xf32> to vector<32xf32>
    %9 = vector.shape_cast %8 : vector<32xf32> to vector<32x1xf32>
    %cst_8 = arith.constant 3.200000e+01 : f32
    %10 = vector.broadcast %cst_8 : f32 to vector<32x1xf32>
    %11 = arith.divf %9, %10 : vector<32x1xf32>
    %12 = vector.broadcast %11 : vector<32x1xf32> to vector<32x32xf32>
    %13 = arith.subf %5, %12 : vector<32x32xf32>
    %14 = arith.mulf %13, %13 : vector<32x32xf32>
    %cst_9 = arith.constant dense<0.000000e+00> : vector<32xf32>
    %15 = vector.multi_reduction <add>, %14, %cst_9 [1] : vector<32x32xf32> to vector<32xf32>
    %16 = vector.shape_cast %15 : vector<32xf32> to vector<32x1xf32>
    %cst_10 = arith.constant 3.200000e+01 : f32
    %17 = vector.broadcast %cst_10 : f32 to vector<32x1xf32>
    %18 = arith.divf %16, %17 : vector<32x1xf32>
    %19 = vector.broadcast %11 : vector<32x1xf32> to vector<32x32xf32>
    %20 = arith.subf %5, %19 : vector<32x32xf32>
    %cst_11 = arith.constant 9.99999974E-6 : f32
    %21 = vector.broadcast %cst_11 : f32 to vector<32x1xf32>
    %22 = arith.addf %18, %21 : vector<32x1xf32>
    %23 = math.rsqrt %22 : vector<32x1xf32>
    %24 = vector.broadcast %23 : vector<32x1xf32> to vector<32x32xf32>
    %25 = arith.mulf %20, %24 : vector<32x32xf32>
    %26 = vector.broadcast %6 : vector<1x32xf32> to vector<32x32xf32>
    %27 = arith.mulf %25, %26 : vector<32x32xf32>
    %28 = vector.broadcast %7 : vector<1x32xf32> to vector<32x32xf32>
    %29 = arith.addf %27, %28 : vector<32x32xf32>
    %c0_12 = arith.constant 0 : index
    %c0_13 = arith.constant 0 : index
    %c0_14 = arith.constant 0 : index
    %30 = vector.load %arg3[%c0_12, %c0_13, %c0_14] : memref<2x8x16xbf16, #tpu.memory_space<vmem>>, vector<1x8x16xbf16>
    %31 = vector.shape_cast %30 : vector<1x8x16xbf16> to vector<8x16xbf16>
    %c0_15 = arith.constant 0 : index
    %c0_16 = arith.constant 0 : index
    %c0_17 = arith.constant 0 : index
    %32 = vector.load %arg4[%c0_15, %c0_16, %c0_17] : memref<2x16x8xbf16, #tpu.memory_space<vmem>>, vector<1x16x8xbf16>
    %33 = vector.shape_cast %32 : vector<1x16x8xbf16> to vector<16x8xbf16>
    %c0_18 = arith.constant 0 : index
    %c0_19 = arith.constant 0 : index
    %c0_20 = arith.constant 0 : index
    %34 = vector.load %arg8[%c0_18, %c0_19, %c0_20] : memref<2x8x1xf32, #tpu.memory_space<vmem>>, vector<1x8x1xf32>
    %35 = vector.shape_cast %34 : vector<1x8x1xf32> to vector<8x1xf32>
    %c0_21 = arith.constant 0 : index
    %c0_22 = arith.constant 0 : index
    %c0_23 = arith.constant 0 : index
    %36 = vector.load %arg9[%c0_21, %c0_22, %c0_23] : memref<2x16x1xf32, #tpu.memory_space<vmem>>, vector<1x16x1xf32>
    %37 = vector.shape_cast %36 : vector<1x16x1xf32> to vector<16x1xf32>
    %38 = vector.extract_strided_slice %29 {offsets = [0, 0], sizes = [16, 32], strides = [1, 1]} : vector<32x32xf32> to vector<16x32xf32>
    %39 = arith.truncf %38 : vector<16x32xf32> to vector<16x32xbf16>
    %cst_24 = arith.constant dense<0.000000e+00> : vector<8x32xf32>
    %40 = tpu.matmul %31, %39, %cst_24 {dimension_numbers = #tpu.dot_dimension_numbers<[1], [0], [0], [1], [0, 0, 1, 1], [], []>} : vector<8x16xbf16>, vector<16x32xbf16>, vector<8x32xf32> -> vector<8x32xf32>
    %41 = vector.broadcast %35 : vector<8x1xf32> to vector<8x32xf32>
    %42 = arith.addf %40, %41 : vector<8x32xf32>
    %cst_25 = arith.constant 5.000000e-01 : f32
    %43 = vector.broadcast %cst_25 : f32 to vector<8x32xf32>
    %44 = arith.mulf %43, %42 : vector<8x32xf32>
    %cst_26 = arith.constant 0.707106769 : f32
    %45 = vector.broadcast %cst_26 : f32 to vector<8x32xf32>
    %46 = arith.mulf %42, %45 : vector<8x32xf32>
    %cst_27 = arith.constant 0.000000e+00 : f32
    %47 = vector.broadcast %cst_27 : f32 to vector<8x32xf32>
    %48 = arith.cmpf olt, %46, %47 : vector<8x32xf32>
    %cst_28 = arith.constant -1.000000e+00 : f32
    %cst_29 = arith.constant 1.000000e+00 : f32
    %49 = vector.broadcast %cst_28 : f32 to vector<8x32xf32>
    %50 = vector.broadcast %cst_29 : f32 to vector<8x32xf32>
    %51 = arith.select %48, %49, %50 : vector<8x32xi1>, vector<8x32xf32>
    %52 = math.absf %46 : vector<8x32xf32>
    %cst_30 = arith.constant 0.327591091 : f32
    %53 = vector.broadcast %cst_30 : f32 to vector<8x32xf32>
    %54 = arith.mulf %53, %52 : vector<8x32xf32>
    %cst_31 = arith.constant 1.000000e+00 : f32
    %55 = vector.broadcast %cst_31 : f32 to vector<8x32xf32>
    %56 = arith.addf %55, %54 : vector<8x32xf32>
    %57 = tpu.reciprocal %56 {approx = true} : vector<8x32xf32> -> vector<8x32xf32>
    %cst_32 = arith.constant 1.06140542 : f32
    %58 = vector.broadcast %cst_32 : f32 to vector<8x32xf32>
    %59 = arith.mulf %58, %57 : vector<8x32xf32>
    %cst_33 = arith.constant -1.45315206 : f32
    %60 = vector.broadcast %cst_33 : f32 to vector<8x32xf32>
    %61 = arith.addf %59, %60 : vector<8x32xf32>
    %62 = arith.mulf %61, %57 : vector<8x32xf32>
    %cst_34 = arith.constant 1.42141378 : f32
    %63 = vector.broadcast %cst_34 : f32 to vector<8x32xf32>
    %64 = arith.addf %62, %63 : vector<8x32xf32>
    %65 = arith.mulf %64, %57 : vector<8x32xf32>
    %cst_35 = arith.constant -0.284496725 : f32
    %66 = vector.broadcast %cst_35 : f32 to vector<8x32xf32>
    %67 = arith.addf %65, %66 : vector<8x32xf32>
    %68 = arith.mulf %67, %57 : vector<8x32xf32>
    %cst_36 = arith.constant 0.254829586 : f32
    %69 = vector.broadcast %cst_36 : f32 to vector<8x32xf32>
    %70 = arith.addf %68, %69 : vector<8x32xf32>
    %71 = arith.mulf %70, %57 : vector<8x32xf32>
    %cst_37 = arith.constant 0.000000e+00 : f32
    %72 = vector.broadcast %cst_37 : f32 to vector<8x32xf32>
    %73 = arith.subf %72, %52 : vector<8x32xf32>
    %74 = arith.mulf %73, %52 : vector<8x32xf32>
    %75 = math.exp %74 : vector<8x32xf32>
    %76 = arith.mulf %71, %75 : vector<8x32xf32>
    %cst_38 = arith.constant 1.000000e+00 : f32
    %77 = vector.broadcast %cst_38 : f32 to vector<8x32xf32>
    %78 = arith.subf %77, %76 : vector<8x32xf32>
    %79 = arith.mulf %51, %78 : vector<8x32xf32>
    %cst_39 = arith.constant 1.000000e+00 : f32
    %80 = vector.broadcast %cst_39 : f32 to vector<8x32xf32>
    %81 = arith.addf %80, %79 : vector<8x32xf32>
    %82 = arith.mulf %44, %81 : vector<8x32xf32>
    %83 = arith.truncf %82 : vector<8x32xf32> to vector<8x32xbf16>
    %cst_40 = arith.constant dense<0.000000e+00> : vector<16x32xf32>
    %84 = tpu.matmul %33, %83, %cst_40 {dimension_numbers = #tpu.dot_dimension_numbers<[1], [0], [0], [1], [0, 0, 1, 1], [], []>} : vector<16x8xbf16>, vector<8x32xbf16>, vector<16x32xf32> -> vector<16x32xf32>
    %85 = vector.broadcast %37 : vector<16x1xf32> to vector<16x32xf32>
    %86 = arith.addf %84, %85 : vector<16x32xf32>
    %87 = vector.extract_strided_slice %29 {offsets = [16, 0], sizes = [16, 32], strides = [1, 1]} : vector<32x32xf32> to vector<16x32xf32>
    %88 = arith.truncf %87 : vector<16x32xf32> to vector<16x32xbf16>
    %cst_41 = arith.constant dense<0.000000e+00> : vector<8x32xf32>
    %89 = tpu.matmul %31, %88, %cst_41 {dimension_numbers = #tpu.dot_dimension_numbers<[1], [0], [0], [1], [0, 0, 1, 1], [], []>} : vector<8x16xbf16>, vector<16x32xbf16>, vector<8x32xf32> -> vector<8x32xf32>
    %90 = vector.broadcast %35 : vector<8x1xf32> to vector<8x32xf32>
    %91 = arith.addf %89, %90 : vector<8x32xf32>
    %cst_42 = arith.constant 5.000000e-01 : f32
    %92 = vector.broadcast %cst_42 : f32 to vector<8x32xf32>
    %93 = arith.mulf %92, %91 : vector<8x32xf32>
    %cst_43 = arith.constant 0.707106769 : f32
    %94 = vector.broadcast %cst_43 : f32 to vector<8x32xf32>
    %95 = arith.mulf %91, %94 : vector<8x32xf32>
    %cst_44 = arith.constant 0.000000e+00 : f32
    %96 = vector.broadcast %cst_44 : f32 to vector<8x32xf32>
    %97 = arith.cmpf olt, %95, %96 : vector<8x32xf32>
    %cst_45 = arith.constant -1.000000e+00 : f32
    %cst_46 = arith.constant 1.000000e+00 : f32
    %98 = vector.broadcast %cst_45 : f32 to vector<8x32xf32>
    %99 = vector.broadcast %cst_46 : f32 to vector<8x32xf32>
    %100 = arith.select %97, %98, %99 : vector<8x32xi1>, vector<8x32xf32>
    %101 = math.absf %95 : vector<8x32xf32>
    %cst_47 = arith.constant 0.327591091 : f32
    %102 = vector.broadcast %cst_47 : f32 to vector<8x32xf32>
    %103 = arith.mulf %102, %101 : vector<8x32xf32>
    %cst_48 = arith.constant 1.000000e+00 : f32
    %104 = vector.broadcast %cst_48 : f32 to vector<8x32xf32>
    %105 = arith.addf %104, %103 : vector<8x32xf32>
    %106 = tpu.reciprocal %105 {approx = true} : vector<8x32xf32> -> vector<8x32xf32>
    %cst_49 = arith.constant 1.06140542 : f32
    %107 = vector.broadcast %cst_49 : f32 to vector<8x32xf32>
    %108 = arith.mulf %107, %106 : vector<8x32xf32>
    %cst_50 = arith.constant -1.45315206 : f32
    %109 = vector.broadcast %cst_50 : f32 to vector<8x32xf32>
    %110 = arith.addf %108, %109 : vector<8x32xf32>
    %111 = arith.mulf %110, %106 : vector<8x32xf32>
    %cst_51 = arith.constant 1.42141378 : f32
    %112 = vector.broadcast %cst_51 : f32 to vector<8x32xf32>
    %113 = arith.addf %111, %112 : vector<8x32xf32>
    %114 = arith.mulf %113, %106 : vector<8x32xf32>
    %cst_52 = arith.constant -0.284496725 : f32
    %115 = vector.broadcast %cst_52 : f32 to vector<8x32xf32>
    %116 = arith.addf %114, %115 : vector<8x32xf32>
    %117 = arith.mulf %116, %106 : vector<8x32xf32>
    %cst_53 = arith.constant 0.254829586 : f32
    %118 = vector.broadcast %cst_53 : f32 to vector<8x32xf32>
    %119 = arith.addf %117, %118 : vector<8x32xf32>
    %120 = arith.mulf %119, %106 : vector<8x32xf32>
    %cst_54 = arith.constant 0.000000e+00 : f32
    %121 = vector.broadcast %cst_54 : f32 to vector<8x32xf32>
    %122 = arith.subf %121, %101 : vector<8x32xf32>
    %123 = arith.mulf %122, %101 : vector<8x32xf32>
    %124 = math.exp %123 : vector<8x32xf32>
    %125 = arith.mulf %120, %124 : vector<8x32xf32>
    %cst_55 = arith.constant 1.000000e+00 : f32
    %126 = vector.broadcast %cst_55 : f32 to vector<8x32xf32>
    %127 = arith.subf %126, %125 : vector<8x32xf32>
    %128 = arith.mulf %100, %127 : vector<8x32xf32>
    %cst_56 = arith.constant 1.000000e+00 : f32
    %129 = vector.broadcast %cst_56 : f32 to vector<8x32xf32>
    %130 = arith.addf %129, %128 : vector<8x32xf32>
    %131 = arith.mulf %93, %130 : vector<8x32xf32>
    %132 = arith.truncf %131 : vector<8x32xf32> to vector<8x32xbf16>
    %cst_57 = arith.constant dense<0.000000e+00> : vector<16x32xf32>
    %133 = tpu.matmul %33, %132, %cst_57 {dimension_numbers = #tpu.dot_dimension_numbers<[1], [0], [0], [1], [0, 0, 1, 1], [], []>} : vector<16x8xbf16>, vector<8x32xbf16>, vector<16x32xf32> -> vector<16x32xf32>
    %134 = vector.broadcast %37 : vector<16x1xf32> to vector<16x32xf32>
    %135 = arith.addf %133, %134 : vector<16x32xf32>
    %136 = tpu.concatenate %86, %135 in 0 : vector<16x32xf32>, vector<16x32xf32> -> vector<32x32xf32>
    %cst_58 = arith.constant 2.000000e+00 : f32
    %137 = vector.broadcast %cst_58 : f32 to vector<32x32xf32>
    %138 = arith.mulf %137, %136 : vector<32x32xf32>
    %139 = arith.addf %5, %138 : vector<32x32xf32>
    %c3 = arith.constant 3 : index
    %c0_59 = arith.constant 0 : index
    %140 = vector.load %arg10[%c3, %c0_59] : memref<16x128xf32, #tpu.memory_space<vmem>>, vector<1x32xf32>
    %c4 = arith.constant 4 : index
    %c0_60 = arith.constant 0 : index
    %141 = vector.load %arg10[%c4, %c0_60] : memref<16x128xf32, #tpu.memory_space<vmem>>, vector<1x32xf32>
    %cst_61 = arith.constant dense<0.000000e+00> : vector<32xf32>
    %142 = vector.multi_reduction <add>, %139, %cst_61 [1] : vector<32x32xf32> to vector<32xf32>
    %143 = vector.shape_cast %142 : vector<32xf32> to vector<32x1xf32>
    %cst_62 = arith.constant 3.200000e+01 : f32
    %144 = vector.broadcast %cst_62 : f32 to vector<32x1xf32>
    %145 = arith.divf %143, %144 : vector<32x1xf32>
    %146 = vector.broadcast %145 : vector<32x1xf32> to vector<32x32xf32>
    %147 = arith.subf %139, %146 : vector<32x32xf32>
    %148 = arith.mulf %147, %147 : vector<32x32xf32>
    %cst_63 = arith.constant dense<0.000000e+00> : vector<32xf32>
    %149 = vector.multi_reduction <add>, %148, %cst_63 [1] : vector<32x32xf32> to vector<32xf32>
    %150 = vector.shape_cast %149 : vector<32xf32> to vector<32x1xf32>
    %cst_64 = arith.constant 3.200000e+01 : f32
    %151 = vector.broadcast %cst_64 : f32 to vector<32x1xf32>
    %152 = arith.divf %150, %151 : vector<32x1xf32>
    %153 = vector.broadcast %145 : vector<32x1xf32> to vector<32x32xf32>
    %154 = arith.subf %139, %153 : vector<32x32xf32>
    %cst_65 = arith.constant 9.99999974E-6 : f32
    %155 = vector.broadcast %cst_65 : f32 to vector<32x1xf32>
    %156 = arith.addf %152, %155 : vector<32x1xf32>
    %157 = math.rsqrt %156 : vector<32x1xf32>
    %158 = vector.broadcast %157 : vector<32x1xf32> to vector<32x32xf32>
    %159 = arith.mulf %154, %158 : vector<32x32xf32>
    %160 = vector.broadcast %140 : vector<1x32xf32> to vector<32x32xf32>
    %161 = arith.mulf %159, %160 : vector<32x32xf32>
    %162 = vector.broadcast %141 : vector<1x32xf32> to vector<32x32xf32>
    %163 = arith.addf %161, %162 : vector<32x32xf32>
    %c0_66 = arith.constant 0 : index
    %c0_67 = arith.constant 0 : index
    %c0_68 = arith.constant 0 : index
    %164 = vector.load %arg5[%c0_66, %c0_67, %c0_68] : memref<2x32x16xbf16, #tpu.memory_space<vmem>>, vector<1x32x16xbf16>
    %165 = vector.shape_cast %164 : vector<1x32x16xbf16> to vector<32x16xbf16>
    %166 = arith.truncf %163 : vector<32x32xf32> to vector<32x32xbf16>
    %cst_69 = arith.constant dense<0.000000e+00> : vector<32x16xf32>
    %167 = tpu.matmul %166, %165, %cst_69 {dimension_numbers = #tpu.dot_dimension_numbers<[1], [0], [0], [1], [0, 0, 1, 1], [], []>} : vector<32x32xbf16>, vector<32x16xbf16>, vector<32x16xf32> -> vector<32x16xf32>
    %c5 = arith.constant 5 : index
    %c0_70 = arith.constant 0 : index
    %168 = vector.load %arg10[%c5, %c0_70] : memref<16x128xf32, #tpu.memory_space<vmem>>, vector<1x16xf32>
    %169 = vector.broadcast %168 : vector<1x16xf32> to vector<32x16xf32>
    %170 = arith.addf %167, %169 : vector<32x16xf32>
    %cst_71 = arith.constant 5.000000e-01 : f32
    %171 = vector.broadcast %cst_71 : f32 to vector<32x16xf32>
    %172 = arith.mulf %171, %170 : vector<32x16xf32>
    %cst_72 = arith.constant 0.707106769 : f32
    %173 = vector.broadcast %cst_72 : f32 to vector<32x16xf32>
    %174 = arith.mulf %170, %173 : vector<32x16xf32>
    %cst_73 = arith.constant 0.000000e+00 : f32
    %175 = vector.broadcast %cst_73 : f32 to vector<32x16xf32>
    %176 = arith.cmpf olt, %174, %175 : vector<32x16xf32>
    %cst_74 = arith.constant -1.000000e+00 : f32
    %cst_75 = arith.constant 1.000000e+00 : f32
    %177 = vector.broadcast %cst_74 : f32 to vector<32x16xf32>
    %178 = vector.broadcast %cst_75 : f32 to vector<32x16xf32>
    %179 = arith.select %176, %177, %178 : vector<32x16xi1>, vector<32x16xf32>
    %180 = math.absf %174 : vector<32x16xf32>
    %cst_76 = arith.constant 0.327591091 : f32
    %181 = vector.broadcast %cst_76 : f32 to vector<32x16xf32>
    %182 = arith.mulf %181, %180 : vector<32x16xf32>
    %cst_77 = arith.constant 1.000000e+00 : f32
    %183 = vector.broadcast %cst_77 : f32 to vector<32x16xf32>
    %184 = arith.addf %183, %182 : vector<32x16xf32>
    %185 = tpu.reciprocal %184 {approx = true} : vector<32x16xf32> -> vector<32x16xf32>
    %cst_78 = arith.constant 1.06140542 : f32
    %186 = vector.broadcast %cst_78 : f32 to vector<32x16xf32>
    %187 = arith.mulf %186, %185 : vector<32x16xf32>
    %cst_79 = arith.constant -1.45315206 : f32
    %188 = vector.broadcast %cst_79 : f32 to vector<32x16xf32>
    %189 = arith.addf %187, %188 : vector<32x16xf32>
    %190 = arith.mulf %189, %185 : vector<32x16xf32>
    %cst_80 = arith.constant 1.42141378 : f32
    %191 = vector.broadcast %cst_80 : f32 to vector<32x16xf32>
    %192 = arith.addf %190, %191 : vector<32x16xf32>
    %193 = arith.mulf %192, %185 : vector<32x16xf32>
    %cst_81 = arith.constant -0.284496725 : f32
    %194 = vector.broadcast %cst_81 : f32 to vector<32x16xf32>
    %195 = arith.addf %193, %194 : vector<32x16xf32>
    %196 = arith.mulf %195, %185 : vector<32x16xf32>
    %cst_82 = arith.constant 0.254829586 : f32
    %197 = vector.broadcast %cst_82 : f32 to vector<32x16xf32>
    %198 = arith.addf %196, %197 : vector<32x16xf32>
    %199 = arith.mulf %198, %185 : vector<32x16xf32>
    %cst_83 = arith.constant 0.000000e+00 : f32
    %200 = vector.broadcast %cst_83 : f32 to vector<32x16xf32>
    %201 = arith.subf %200, %180 : vector<32x16xf32>
    %202 = arith.mulf %201, %180 : vector<32x16xf32>
    %203 = math.exp %202 : vector<32x16xf32>
    %204 = arith.mulf %199, %203 : vector<32x16xf32>
    %cst_84 = arith.constant 1.000000e+00 : f32
    %205 = vector.broadcast %cst_84 : f32 to vector<32x16xf32>
    %206 = arith.subf %205, %204 : vector<32x16xf32>
    %207 = arith.mulf %179, %206 : vector<32x16xf32>
    %cst_85 = arith.constant 1.000000e+00 : f32
    %208 = vector.broadcast %cst_85 : f32 to vector<32x16xf32>
    %209 = arith.addf %208, %207 : vector<32x16xf32>
    %210 = arith.mulf %172, %209 : vector<32x16xf32>
    %c0_86 = arith.constant 0 : index
    %c0_87 = arith.constant 0 : index
    %c0_88 = arith.constant 0 : index
    %211 = vector.load %arg6[%c0_86, %c0_87, %c0_88] : memref<2x16x32xbf16, #tpu.memory_space<vmem>>, vector<1x16x32xbf16>
    %212 = vector.shape_cast %211 : vector<1x16x32xbf16> to vector<16x32xbf16>
    %213 = arith.truncf %210 : vector<32x16xf32> to vector<32x16xbf16>
    %cst_89 = arith.constant dense<0.000000e+00> : vector<32x32xf32>
    %214 = tpu.matmul %213, %212, %cst_89 {dimension_numbers = #tpu.dot_dimension_numbers<[1], [0], [0], [1], [0, 0, 1, 1], [], []>} : vector<32x16xbf16>, vector<16x32xbf16>, vector<32x32xf32> -> vector<32x32xf32>
    %c6 = arith.constant 6 : index
    %c0_90 = arith.constant 0 : index
    %215 = vector.load %arg10[%c6, %c0_90] : memref<16x128xf32, #tpu.memory_space<vmem>>, vector<1x32xf32>
    %216 = vector.broadcast %215 : vector<1x32xf32> to vector<32x32xf32>
    %217 = arith.addf %214, %216 : vector<32x32xf32>
    %cst_91 = arith.constant 2.000000e+00 : f32
    %218 = vector.broadcast %cst_91 : f32 to vector<32x32xf32>
    %219 = arith.mulf %218, %217 : vector<32x32xf32>
    %220 = arith.addf %139, %219 : vector<32x32xf32>
    %c7 = arith.constant 7 : index
    %c0_92 = arith.constant 0 : index
    %221 = vector.load %arg10[%c7, %c0_92] : memref<16x128xf32, #tpu.memory_space<vmem>>, vector<1x32xf32>
    %c8 = arith.constant 8 : index
    %c0_93 = arith.constant 0 : index
    %222 = vector.load %arg10[%c8, %c0_93] : memref<16x128xf32, #tpu.memory_space<vmem>>, vector<1x32xf32>
    %cst_94 = arith.constant dense<0.000000e+00> : vector<32xf32>
    %223 = vector.multi_reduction <add>, %220, %cst_94 [1] : vector<32x32xf32> to vector<32xf32>
    %224 = vector.shape_cast %223 : vector<32xf32> to vector<32x1xf32>
    %cst_95 = arith.constant 3.200000e+01 : f32
    %225 = vector.broadcast %cst_95 : f32 to vector<32x1xf32>
    %226 = arith.divf %224, %225 : vector<32x1xf32>
    %227 = vector.broadcast %226 : vector<32x1xf32> to vector<32x32xf32>
    %228 = arith.subf %220, %227 : vector<32x32xf32>
    %229 = arith.mulf %228, %228 : vector<32x32xf32>
    %cst_96 = arith.constant dense<0.000000e+00> : vector<32xf32>
    %230 = vector.multi_reduction <add>, %229, %cst_96 [1] : vector<32x32xf32> to vector<32xf32>
    %231 = vector.shape_cast %230 : vector<32xf32> to vector<32x1xf32>
    %cst_97 = arith.constant 3.200000e+01 : f32
    %232 = vector.broadcast %cst_97 : f32 to vector<32x1xf32>
    %233 = arith.divf %231, %232 : vector<32x1xf32>
    %234 = vector.broadcast %226 : vector<32x1xf32> to vector<32x32xf32>
    %235 = arith.subf %220, %234 : vector<32x32xf32>
    %cst_98 = arith.constant 9.99999974E-6 : f32
    %236 = vector.broadcast %cst_98 : f32 to vector<32x1xf32>
    %237 = arith.addf %233, %236 : vector<32x1xf32>
    %238 = math.rsqrt %237 : vector<32x1xf32>
    %239 = vector.broadcast %238 : vector<32x1xf32> to vector<32x32xf32>
    %240 = arith.mulf %235, %239 : vector<32x32xf32>
    %241 = vector.broadcast %221 : vector<1x32xf32> to vector<32x32xf32>
    %242 = arith.mulf %240, %241 : vector<32x32xf32>
    %243 = vector.broadcast %222 : vector<1x32xf32> to vector<32x32xf32>
    %244 = arith.addf %242, %243 : vector<32x32xf32>
    %c1_99 = arith.constant 1 : index
    %c0_100 = arith.constant 0 : index
    %c0_101 = arith.constant 0 : index
    %245 = vector.load %arg3[%c1_99, %c0_100, %c0_101] : memref<2x8x16xbf16, #tpu.memory_space<vmem>>, vector<1x8x16xbf16>
    %246 = vector.shape_cast %245 : vector<1x8x16xbf16> to vector<8x16xbf16>
    %c1_102 = arith.constant 1 : index
    %c0_103 = arith.constant 0 : index
    %c0_104 = arith.constant 0 : index
    %247 = vector.load %arg4[%c1_102, %c0_103, %c0_104] : memref<2x16x8xbf16, #tpu.memory_space<vmem>>, vector<1x16x8xbf16>
    %248 = vector.shape_cast %247 : vector<1x16x8xbf16> to vector<16x8xbf16>
    %c1_105 = arith.constant 1 : index
    %c0_106 = arith.constant 0 : index
    %c0_107 = arith.constant 0 : index
    %249 = vector.load %arg8[%c1_105, %c0_106, %c0_107] : memref<2x8x1xf32, #tpu.memory_space<vmem>>, vector<1x8x1xf32>
    %250 = vector.shape_cast %249 : vector<1x8x1xf32> to vector<8x1xf32>
    %c1_108 = arith.constant 1 : index
    %c0_109 = arith.constant 0 : index
    %c0_110 = arith.constant 0 : index
    %251 = vector.load %arg9[%c1_108, %c0_109, %c0_110] : memref<2x16x1xf32, #tpu.memory_space<vmem>>, vector<1x16x1xf32>
    %252 = vector.shape_cast %251 : vector<1x16x1xf32> to vector<16x1xf32>
    %253 = vector.extract_strided_slice %244 {offsets = [0, 0], sizes = [16, 32], strides = [1, 1]} : vector<32x32xf32> to vector<16x32xf32>
    %254 = arith.truncf %253 : vector<16x32xf32> to vector<16x32xbf16>
    %cst_111 = arith.constant dense<0.000000e+00> : vector<8x32xf32>
    %255 = tpu.matmul %246, %254, %cst_111 {dimension_numbers = #tpu.dot_dimension_numbers<[1], [0], [0], [1], [0, 0, 1, 1], [], []>} : vector<8x16xbf16>, vector<16x32xbf16>, vector<8x32xf32> -> vector<8x32xf32>
    %256 = vector.broadcast %250 : vector<8x1xf32> to vector<8x32xf32>
    %257 = arith.addf %255, %256 : vector<8x32xf32>
    %cst_112 = arith.constant 5.000000e-01 : f32
    %258 = vector.broadcast %cst_112 : f32 to vector<8x32xf32>
    %259 = arith.mulf %258, %257 : vector<8x32xf32>
    %cst_113 = arith.constant 0.707106769 : f32
    %260 = vector.broadcast %cst_113 : f32 to vector<8x32xf32>
    %261 = arith.mulf %257, %260 : vector<8x32xf32>
    %cst_114 = arith.constant 0.000000e+00 : f32
    %262 = vector.broadcast %cst_114 : f32 to vector<8x32xf32>
    %263 = arith.cmpf olt, %261, %262 : vector<8x32xf32>
    %cst_115 = arith.constant -1.000000e+00 : f32
    %cst_116 = arith.constant 1.000000e+00 : f32
    %264 = vector.broadcast %cst_115 : f32 to vector<8x32xf32>
    %265 = vector.broadcast %cst_116 : f32 to vector<8x32xf32>
    %266 = arith.select %263, %264, %265 : vector<8x32xi1>, vector<8x32xf32>
    %267 = math.absf %261 : vector<8x32xf32>
    %cst_117 = arith.constant 0.327591091 : f32
    %268 = vector.broadcast %cst_117 : f32 to vector<8x32xf32>
    %269 = arith.mulf %268, %267 : vector<8x32xf32>
    %cst_118 = arith.constant 1.000000e+00 : f32
    %270 = vector.broadcast %cst_118 : f32 to vector<8x32xf32>
    %271 = arith.addf %270, %269 : vector<8x32xf32>
    %272 = tpu.reciprocal %271 {approx = true} : vector<8x32xf32> -> vector<8x32xf32>
    %cst_119 = arith.constant 1.06140542 : f32
    %273 = vector.broadcast %cst_119 : f32 to vector<8x32xf32>
    %274 = arith.mulf %273, %272 : vector<8x32xf32>
    %cst_120 = arith.constant -1.45315206 : f32
    %275 = vector.broadcast %cst_120 : f32 to vector<8x32xf32>
    %276 = arith.addf %274, %275 : vector<8x32xf32>
    %277 = arith.mulf %276, %272 : vector<8x32xf32>
    %cst_121 = arith.constant 1.42141378 : f32
    %278 = vector.broadcast %cst_121 : f32 to vector<8x32xf32>
    %279 = arith.addf %277, %278 : vector<8x32xf32>
    %280 = arith.mulf %279, %272 : vector<8x32xf32>
    %cst_122 = arith.constant -0.284496725 : f32
    %281 = vector.broadcast %cst_122 : f32 to vector<8x32xf32>
    %282 = arith.addf %280, %281 : vector<8x32xf32>
    %283 = arith.mulf %282, %272 : vector<8x32xf32>
    %cst_123 = arith.constant 0.254829586 : f32
    %284 = vector.broadcast %cst_123 : f32 to vector<8x32xf32>
    %285 = arith.addf %283, %284 : vector<8x32xf32>
    %286 = arith.mulf %285, %272 : vector<8x32xf32>
    %cst_124 = arith.constant 0.000000e+00 : f32
    %287 = vector.broadcast %cst_124 : f32 to vector<8x32xf32>
    %288 = arith.subf %287, %267 : vector<8x32xf32>
    %289 = arith.mulf %288, %267 : vector<8x32xf32>
    %290 = math.exp %289 : vector<8x32xf32>
    %291 = arith.mulf %286, %290 : vector<8x32xf32>
    %cst_125 = arith.constant 1.000000e+00 : f32
    %292 = vector.broadcast %cst_125 : f32 to vector<8x32xf32>
    %293 = arith.subf %292, %291 : vector<8x32xf32>
    %294 = arith.mulf %266, %293 : vector<8x32xf32>
    %cst_126 = arith.constant 1.000000e+00 : f32
    %295 = vector.broadcast %cst_126 : f32 to vector<8x32xf32>
    %296 = arith.addf %295, %294 : vector<8x32xf32>
    %297 = arith.mulf %259, %296 : vector<8x32xf32>
    %298 = arith.truncf %297 : vector<8x32xf32> to vector<8x32xbf16>
    %cst_127 = arith.constant dense<0.000000e+00> : vector<16x32xf32>
    %299 = tpu.matmul %248, %298, %cst_127 {dimension_numbers = #tpu.dot_dimension_numbers<[1], [0], [0], [1], [0, 0, 1, 1], [], []>} : vector<16x8xbf16>, vector<8x32xbf16>, vector<16x32xf32> -> vector<16x32xf32>
    %300 = vector.broadcast %252 : vector<16x1xf32> to vector<16x32xf32>
    %301 = arith.addf %299, %300 : vector<16x32xf32>
    %302 = vector.extract_strided_slice %244 {offsets = [16, 0], sizes = [16, 32], strides = [1, 1]} : vector<32x32xf32> to vector<16x32xf32>
    %303 = arith.truncf %302 : vector<16x32xf32> to vector<16x32xbf16>
    %cst_128 = arith.constant dense<0.000000e+00> : vector<8x32xf32>
    %304 = tpu.matmul %246, %303, %cst_128 {dimension_numbers = #tpu.dot_dimension_numbers<[1], [0], [0], [1], [0, 0, 1, 1], [], []>} : vector<8x16xbf16>, vector<16x32xbf16>, vector<8x32xf32> -> vector<8x32xf32>
    %305 = vector.broadcast %250 : vector<8x1xf32> to vector<8x32xf32>
    %306 = arith.addf %304, %305 : vector<8x32xf32>
    %cst_129 = arith.constant 5.000000e-01 : f32
    %307 = vector.broadcast %cst_129 : f32 to vector<8x32xf32>
    %308 = arith.mulf %307, %306 : vector<8x32xf32>
    %cst_130 = arith.constant 0.707106769 : f32
    %309 = vector.broadcast %cst_130 : f32 to vector<8x32xf32>
    %310 = arith.mulf %306, %309 : vector<8x32xf32>
    %cst_131 = arith.constant 0.000000e+00 : f32
    %311 = vector.broadcast %cst_131 : f32 to vector<8x32xf32>
    %312 = arith.cmpf olt, %310, %311 : vector<8x32xf32>
    %cst_132 = arith.constant -1.000000e+00 : f32
    %cst_133 = arith.constant 1.000000e+00 : f32
    %313 = vector.broadcast %cst_132 : f32 to vector<8x32xf32>
    %314 = vector.broadcast %cst_133 : f32 to vector<8x32xf32>
    %315 = arith.select %312, %313, %314 : vector<8x32xi1>, vector<8x32xf32>
    %316 = math.absf %310 : vector<8x32xf32>
    %cst_134 = arith.constant 0.327591091 : f32
    %317 = vector.broadcast %cst_134 : f32 to vector<8x32xf32>
    %318 = arith.mulf %317, %316 : vector<8x32xf32>
    %cst_135 = arith.constant 1.000000e+00 : f32
    %319 = vector.broadcast %cst_135 : f32 to vector<8x32xf32>
    %320 = arith.addf %319, %318 : vector<8x32xf32>
    %321 = tpu.reciprocal %320 {approx = true} : vector<8x32xf32> -> vector<8x32xf32>
    %cst_136 = arith.constant 1.06140542 : f32
    %322 = vector.broadcast %cst_136 : f32 to vector<8x32xf32>
    %323 = arith.mulf %322, %321 : vector<8x32xf32>
    %cst_137 = arith.constant -1.45315206 : f32
    %324 = vector.broadcast %cst_137 : f32 to vector<8x32xf32>
    %325 = arith.addf %323, %324 : vector<8x32xf32>
    %326 = arith.mulf %325, %321 : vector<8x32xf32>
    %cst_138 = arith.constant 1.42141378 : f32
    %327 = vector.broadcast %cst_138 : f32 to vector<8x32xf32>
    %328 = arith.addf %326, %327 : vector<8x32xf32>
    %329 = arith.mulf %328, %321 : vector<8x32xf32>
    %cst_139 = arith.constant -0.284496725 : f32
    %330 = vector.broadcast %cst_139 : f32 to vector<8x32xf32>
    %331 = arith.addf %329, %330 : vector<8x32xf32>
    %332 = arith.mulf %331, %321 : vector<8x32xf32>
    %cst_140 = arith.constant 0.254829586 : f32
    %333 = vector.broadcast %cst_140 : f32 to vector<8x32xf32>
    %334 = arith.addf %332, %333 : vector<8x32xf32>
    %335 = arith.mulf %334, %321 : vector<8x32xf32>
    %cst_141 = arith.constant 0.000000e+00 : f32
    %336 = vector.broadcast %cst_141 : f32 to vector<8x32xf32>
    %337 = arith.subf %336, %316 : vector<8x32xf32>
    %338 = arith.mulf %337, %316 : vector<8x32xf32>
    %339 = math.exp %338 : vector<8x32xf32>
    %340 = arith.mulf %335, %339 : vector<8x32xf32>
    %cst_142 = arith.constant 1.000000e+00 : f32
    %341 = vector.broadcast %cst_142 : f32 to vector<8x32xf32>
    %342 = arith.subf %341, %340 : vector<8x32xf32>
    %343 = arith.mulf %315, %342 : vector<8x32xf32>
    %cst_143 = arith.constant 1.000000e+00 : f32
    %344 = vector.broadcast %cst_143 : f32 to vector<8x32xf32>
    %345 = arith.addf %344, %343 : vector<8x32xf32>
    %346 = arith.mulf %308, %345 : vector<8x32xf32>
    %347 = arith.truncf %346 : vector<8x32xf32> to vector<8x32xbf16>
    %cst_144 = arith.constant dense<0.000000e+00> : vector<16x32xf32>
    %348 = tpu.matmul %248, %347, %cst_144 {dimension_numbers = #tpu.dot_dimension_numbers<[1], [0], [0], [1], [0, 0, 1, 1], [], []>} : vector<16x8xbf16>, vector<8x32xbf16>, vector<16x32xf32> -> vector<16x32xf32>
    %349 = vector.broadcast %252 : vector<16x1xf32> to vector<16x32xf32>
    %350 = arith.addf %348, %349 : vector<16x32xf32>
    %351 = tpu.concatenate %301, %350 in 0 : vector<16x32xf32>, vector<16x32xf32> -> vector<32x32xf32>
    %cst_145 = arith.constant 2.000000e+00 : f32
    %352 = vector.broadcast %cst_145 : f32 to vector<32x32xf32>
    %353 = arith.mulf %352, %351 : vector<32x32xf32>
    %354 = arith.addf %220, %353 : vector<32x32xf32>
    %c9 = arith.constant 9 : index
    %c0_146 = arith.constant 0 : index
    %355 = vector.load %arg10[%c9, %c0_146] : memref<16x128xf32, #tpu.memory_space<vmem>>, vector<1x32xf32>
    %c10 = arith.constant 10 : index
    %c0_147 = arith.constant 0 : index
    %356 = vector.load %arg10[%c10, %c0_147] : memref<16x128xf32, #tpu.memory_space<vmem>>, vector<1x32xf32>
    %cst_148 = arith.constant dense<0.000000e+00> : vector<32xf32>
    %357 = vector.multi_reduction <add>, %354, %cst_148 [1] : vector<32x32xf32> to vector<32xf32>
    %358 = vector.shape_cast %357 : vector<32xf32> to vector<32x1xf32>
    %cst_149 = arith.constant 3.200000e+01 : f32
    %359 = vector.broadcast %cst_149 : f32 to vector<32x1xf32>
    %360 = arith.divf %358, %359 : vector<32x1xf32>
    %361 = vector.broadcast %360 : vector<32x1xf32> to vector<32x32xf32>
    %362 = arith.subf %354, %361 : vector<32x32xf32>
    %363 = arith.mulf %362, %362 : vector<32x32xf32>
    %cst_150 = arith.constant dense<0.000000e+00> : vector<32xf32>
    %364 = vector.multi_reduction <add>, %363, %cst_150 [1] : vector<32x32xf32> to vector<32xf32>
    %365 = vector.shape_cast %364 : vector<32xf32> to vector<32x1xf32>
    %cst_151 = arith.constant 3.200000e+01 : f32
    %366 = vector.broadcast %cst_151 : f32 to vector<32x1xf32>
    %367 = arith.divf %365, %366 : vector<32x1xf32>
    %368 = vector.broadcast %360 : vector<32x1xf32> to vector<32x32xf32>
    %369 = arith.subf %354, %368 : vector<32x32xf32>
    %cst_152 = arith.constant 9.99999974E-6 : f32
    %370 = vector.broadcast %cst_152 : f32 to vector<32x1xf32>
    %371 = arith.addf %367, %370 : vector<32x1xf32>
    %372 = math.rsqrt %371 : vector<32x1xf32>
    %373 = vector.broadcast %372 : vector<32x1xf32> to vector<32x32xf32>
    %374 = arith.mulf %369, %373 : vector<32x32xf32>
    %375 = vector.broadcast %355 : vector<1x32xf32> to vector<32x32xf32>
    %376 = arith.mulf %374, %375 : vector<32x32xf32>
    %377 = vector.broadcast %356 : vector<1x32xf32> to vector<32x32xf32>
    %378 = arith.addf %376, %377 : vector<32x32xf32>
    %c1_153 = arith.constant 1 : index
    %c0_154 = arith.constant 0 : index
    %c0_155 = arith.constant 0 : index
    %379 = vector.load %arg5[%c1_153, %c0_154, %c0_155] : memref<2x32x16xbf16, #tpu.memory_space<vmem>>, vector<1x32x16xbf16>
    %380 = vector.shape_cast %379 : vector<1x32x16xbf16> to vector<32x16xbf16>
    %381 = arith.truncf %378 : vector<32x32xf32> to vector<32x32xbf16>
    %cst_156 = arith.constant dense<0.000000e+00> : vector<32x16xf32>
    %382 = tpu.matmul %381, %380, %cst_156 {dimension_numbers = #tpu.dot_dimension_numbers<[1], [0], [0], [1], [0, 0, 1, 1], [], []>} : vector<32x32xbf16>, vector<32x16xbf16>, vector<32x16xf32> -> vector<32x16xf32>
    %c11 = arith.constant 11 : index
    %c0_157 = arith.constant 0 : index
    %383 = vector.load %arg10[%c11, %c0_157] : memref<16x128xf32, #tpu.memory_space<vmem>>, vector<1x16xf32>
    %384 = vector.broadcast %383 : vector<1x16xf32> to vector<32x16xf32>
    %385 = arith.addf %382, %384 : vector<32x16xf32>
    %cst_158 = arith.constant 5.000000e-01 : f32
    %386 = vector.broadcast %cst_158 : f32 to vector<32x16xf32>
    %387 = arith.mulf %386, %385 : vector<32x16xf32>
    %cst_159 = arith.constant 0.707106769 : f32
    %388 = vector.broadcast %cst_159 : f32 to vector<32x16xf32>
    %389 = arith.mulf %385, %388 : vector<32x16xf32>
    %cst_160 = arith.constant 0.000000e+00 : f32
    %390 = vector.broadcast %cst_160 : f32 to vector<32x16xf32>
    %391 = arith.cmpf olt, %389, %390 : vector<32x16xf32>
    %cst_161 = arith.constant -1.000000e+00 : f32
    %cst_162 = arith.constant 1.000000e+00 : f32
    %392 = vector.broadcast %cst_161 : f32 to vector<32x16xf32>
    %393 = vector.broadcast %cst_162 : f32 to vector<32x16xf32>
    %394 = arith.select %391, %392, %393 : vector<32x16xi1>, vector<32x16xf32>
    %395 = math.absf %389 : vector<32x16xf32>
    %cst_163 = arith.constant 0.327591091 : f32
    %396 = vector.broadcast %cst_163 : f32 to vector<32x16xf32>
    %397 = arith.mulf %396, %395 : vector<32x16xf32>
    %cst_164 = arith.constant 1.000000e+00 : f32
    %398 = vector.broadcast %cst_164 : f32 to vector<32x16xf32>
    %399 = arith.addf %398, %397 : vector<32x16xf32>
    %400 = tpu.reciprocal %399 {approx = true} : vector<32x16xf32> -> vector<32x16xf32>
    %cst_165 = arith.constant 1.06140542 : f32
    %401 = vector.broadcast %cst_165 : f32 to vector<32x16xf32>
    %402 = arith.mulf %401, %400 : vector<32x16xf32>
    %cst_166 = arith.constant -1.45315206 : f32
    %403 = vector.broadcast %cst_166 : f32 to vector<32x16xf32>
    %404 = arith.addf %402, %403 : vector<32x16xf32>
    %405 = arith.mulf %404, %400 : vector<32x16xf32>
    %cst_167 = arith.constant 1.42141378 : f32
    %406 = vector.broadcast %cst_167 : f32 to vector<32x16xf32>
    %407 = arith.addf %405, %406 : vector<32x16xf32>
    %408 = arith.mulf %407, %400 : vector<32x16xf32>
    %cst_168 = arith.constant -0.284496725 : f32
    %409 = vector.broadcast %cst_168 : f32 to vector<32x16xf32>
    %410 = arith.addf %408, %409 : vector<32x16xf32>
    %411 = arith.mulf %410, %400 : vector<32x16xf32>
    %cst_169 = arith.constant 0.254829586 : f32
    %412 = vector.broadcast %cst_169 : f32 to vector<32x16xf32>
    %413 = arith.addf %411, %412 : vector<32x16xf32>
    %414 = arith.mulf %413, %400 : vector<32x16xf32>
    %cst_170 = arith.constant 0.000000e+00 : f32
    %415 = vector.broadcast %cst_170 : f32 to vector<32x16xf32>
    %416 = arith.subf %415, %395 : vector<32x16xf32>
    %417 = arith.mulf %416, %395 : vector<32x16xf32>
    %418 = math.exp %417 : vector<32x16xf32>
    %419 = arith.mulf %414, %418 : vector<32x16xf32>
    %cst_171 = arith.constant 1.000000e+00 : f32
    %420 = vector.broadcast %cst_171 : f32 to vector<32x16xf32>
    %421 = arith.subf %420, %419 : vector<32x16xf32>
    %422 = arith.mulf %394, %421 : vector<32x16xf32>
    %cst_172 = arith.constant 1.000000e+00 : f32
    %423 = vector.broadcast %cst_172 : f32 to vector<32x16xf32>
    %424 = arith.addf %423, %422 : vector<32x16xf32>
    %425 = arith.mulf %387, %424 : vector<32x16xf32>
    %c1_173 = arith.constant 1 : index
    %c0_174 = arith.constant 0 : index
    %c0_175 = arith.constant 0 : index
    %426 = vector.load %arg6[%c1_173, %c0_174, %c0_175] : memref<2x16x32xbf16, #tpu.memory_space<vmem>>, vector<1x16x32xbf16>
    %427 = vector.shape_cast %426 : vector<1x16x32xbf16> to vector<16x32xbf16>
    %428 = arith.truncf %425 : vector<32x16xf32> to vector<32x16xbf16>
    %cst_176 = arith.constant dense<0.000000e+00> : vector<32x32xf32>
    %429 = tpu.matmul %428, %427, %cst_176 {dimension_numbers = #tpu.dot_dimension_numbers<[1], [0], [0], [1], [0, 0, 1, 1], [], []>} : vector<32x16xbf16>, vector<16x32xbf16>, vector<32x32xf32> -> vector<32x32xf32>
    %c12 = arith.constant 12 : index
    %c0_177 = arith.constant 0 : index
    %430 = vector.load %arg10[%c12, %c0_177] : memref<16x128xf32, #tpu.memory_space<vmem>>, vector<1x32xf32>
    %431 = vector.broadcast %430 : vector<1x32xf32> to vector<32x32xf32>
    %432 = arith.addf %429, %431 : vector<32x32xf32>
    %cst_178 = arith.constant 2.000000e+00 : f32
    %433 = vector.broadcast %cst_178 : f32 to vector<32x32xf32>
    %434 = arith.mulf %433, %432 : vector<32x32xf32>
    %435 = arith.addf %354, %434 : vector<32x32xf32>
    %c13 = arith.constant 13 : index
    %c0_179 = arith.constant 0 : index
    %436 = vector.load %arg10[%c13, %c0_179] : memref<16x128xf32, #tpu.memory_space<vmem>>, vector<1x32xf32>
    %c14 = arith.constant 14 : index
    %c0_180 = arith.constant 0 : index
    %437 = vector.load %arg10[%c14, %c0_180] : memref<16x128xf32, #tpu.memory_space<vmem>>, vector<1x32xf32>
    %cst_181 = arith.constant dense<0.000000e+00> : vector<32xf32>
    %438 = vector.multi_reduction <add>, %435, %cst_181 [1] : vector<32x32xf32> to vector<32xf32>
    %439 = vector.shape_cast %438 : vector<32xf32> to vector<32x1xf32>
    %cst_182 = arith.constant 3.200000e+01 : f32
    %440 = vector.broadcast %cst_182 : f32 to vector<32x1xf32>
    %441 = arith.divf %439, %440 : vector<32x1xf32>
    %442 = vector.broadcast %441 : vector<32x1xf32> to vector<32x32xf32>
    %443 = arith.subf %435, %442 : vector<32x32xf32>
    %444 = arith.mulf %443, %443 : vector<32x32xf32>
    %cst_183 = arith.constant dense<0.000000e+00> : vector<32xf32>
    %445 = vector.multi_reduction <add>, %444, %cst_183 [1] : vector<32x32xf32> to vector<32xf32>
    %446 = vector.shape_cast %445 : vector<32xf32> to vector<32x1xf32>
    %cst_184 = arith.constant 3.200000e+01 : f32
    %447 = vector.broadcast %cst_184 : f32 to vector<32x1xf32>
    %448 = arith.divf %446, %447 : vector<32x1xf32>
    %449 = vector.broadcast %441 : vector<32x1xf32> to vector<32x32xf32>
    %450 = arith.subf %435, %449 : vector<32x32xf32>
    %cst_185 = arith.constant 9.99999974E-6 : f32
    %451 = vector.broadcast %cst_185 : f32 to vector<32x1xf32>
    %452 = arith.addf %448, %451 : vector<32x1xf32>
    %453 = math.rsqrt %452 : vector<32x1xf32>
    %454 = vector.broadcast %453 : vector<32x1xf32> to vector<32x32xf32>
    %455 = arith.mulf %450, %454 : vector<32x32xf32>
    %456 = vector.broadcast %436 : vector<1x32xf32> to vector<32x32xf32>
    %457 = arith.mulf %455, %456 : vector<32x32xf32>
    %458 = vector.broadcast %437 : vector<1x32xf32> to vector<32x32xf32>
    %459 = arith.addf %457, %458 : vector<32x32xf32>
    %460 = vector.extract_strided_slice %459 {offsets = [0, 0], sizes = [16, 32], strides = [1, 1]} : vector<32x32xf32> to vector<16x32xf32>
    %cst_186 = arith.constant dense<0.000000e+00> : vector<32xf32>
    %461 = vector.multi_reduction <add>, %460, %cst_186 [0] : vector<16x32xf32> to vector<32xf32>
    %462 = vector.shape_cast %461 : vector<32xf32> to vector<1x32xf32>
    %cst_187 = arith.constant 1.600000e+01 : f32
    %463 = vector.broadcast %cst_187 : f32 to vector<1x32xf32>
    %464 = arith.divf %462, %463 : vector<1x32xf32>
    %465 = vector.extract_strided_slice %459 {offsets = [16, 0], sizes = [16, 32], strides = [1, 1]} : vector<32x32xf32> to vector<16x32xf32>
    %cst_188 = arith.constant dense<0.000000e+00> : vector<32xf32>
    %466 = vector.multi_reduction <add>, %465, %cst_188 [0] : vector<16x32xf32> to vector<32xf32>
    %467 = vector.shape_cast %466 : vector<32xf32> to vector<1x32xf32>
    %cst_189 = arith.constant 1.600000e+01 : f32
    %468 = vector.broadcast %cst_189 : f32 to vector<1x32xf32>
    %469 = arith.divf %467, %468 : vector<1x32xf32>
    %470 = tpu.concatenate %464, %469 in 0 : vector<1x32xf32>, vector<1x32xf32> -> vector<2x32xf32>
    %c0_190 = arith.constant 0 : index
    %c0_191 = arith.constant 0 : index
    %471 = vector.load %arg7[%c0_190, %c0_191] : memref<32x128xbf16, #tpu.memory_space<vmem>>, vector<32x128xbf16>
    %472 = arith.truncf %470 : vector<2x32xf32> to vector<2x32xbf16>
    %cst_192 = arith.constant dense<0.000000e+00> : vector<2x128xf32>
    %473 = tpu.matmul %472, %471, %cst_192 {dimension_numbers = #tpu.dot_dimension_numbers<[1], [0], [0], [1], [0, 0, 1, 1], [], []>} : vector<2x32xbf16>, vector<32x128xbf16>, vector<2x128xf32> -> vector<2x128xf32>
    %c15 = arith.constant 15 : index
    %c0_193 = arith.constant 0 : index
    %474 = vector.load %arg10[%c15, %c0_193] : memref<16x128xf32, #tpu.memory_space<vmem>>, vector<1x128xf32>
    %475 = vector.broadcast %474 : vector<1x128xf32> to vector<2x128xf32>
    %476 = arith.addf %473, %475 : vector<2x128xf32>
    %c0_194 = arith.constant 0 : index
    %c0_195 = arith.constant 0 : index
    %477 = vector.load %arg11[%c0_194, %c0_195] : memref<2x128xf32, #tpu.memory_space<vmem>>, vector<2x128xf32>
    tpu.vector_store %arg11[%c0_194, %c0_195], %476 {strides = array<i32>} : memref<2x128xf32, #tpu.memory_space<vmem>>, vector<2x128xf32>,
    return
  }
  func.func @transform_0(%arg0: i32) -> (i32, i32) {
    %c0_i32 = arith.constant 0 : i32
    %c0_i32_0 = arith.constant 0 : i32
    return %arg0, %c0_i32 : i32, i32
  }
  func.func @transform_1(%arg0: i32) -> (i32, i32) {
    %c0_i32 = arith.constant 0 : i32
    %c0_i32_0 = arith.constant 0 : i32
    %c0_i32_1 = arith.constant 0 : i32
    return %c0_i32, %c0_i32_0 : i32, i32
  }
  func.func @transform_2(%arg0: i32) -> (i32, i32, i32) {
    %c0_i32 = arith.constant 0 : i32
    %c0_i32_0 = arith.constant 0 : i32
    %c0_i32_1 = arith.constant 0 : i32
    %c0_i32_2 = arith.constant 0 : i32
    return %c0_i32, %c0_i32_0, %c0_i32_1 : i32, i32, i32
  }
  func.func @transform_3(%arg0: i32) -> (i32, i32, i32) {
    %c0_i32 = arith.constant 0 : i32
    %c0_i32_0 = arith.constant 0 : i32
    %c0_i32_1 = arith.constant 0 : i32
    %c0_i32_2 = arith.constant 0 : i32
    return %c0_i32, %c0_i32_0, %c0_i32_1 : i32, i32, i32
  }
  func.func @transform_4(%arg0: i32) -> (i32, i32, i32) {
    %c0_i32 = arith.constant 0 : i32
    %c0_i32_0 = arith.constant 0 : i32
    %c0_i32_1 = arith.constant 0 : i32
    %c0_i32_2 = arith.constant 0 : i32
    return %c0_i32, %c0_i32_0, %c0_i32_1 : i32, i32, i32
  }
  func.func @transform_5(%arg0: i32) -> (i32, i32, i32) {
    %c0_i32 = arith.constant 0 : i32
    %c0_i32_0 = arith.constant 0 : i32
    %c0_i32_1 = arith.constant 0 : i32
    %c0_i32_2 = arith.constant 0 : i32
    return %c0_i32, %c0_i32_0, %c0_i32_1 : i32, i32, i32
  }
  func.func @transform_6(%arg0: i32) -> (i32, i32) {
    %c0_i32 = arith.constant 0 : i32
    %c0_i32_0 = arith.constant 0 : i32
    %c0_i32_1 = arith.constant 0 : i32
    return %c0_i32, %c0_i32_0 : i32, i32
  }
  func.func @transform_7(%arg0: i32) -> (i32, i32, i32) {
    %c0_i32 = arith.constant 0 : i32
    %c0_i32_0 = arith.constant 0 : i32
    %c0_i32_1 = arith.constant 0 : i32
    %c0_i32_2 = arith.constant 0 : i32
    return %c0_i32, %c0_i32_0, %c0_i32_1 : i32, i32, i32
  }
  func.func @transform_8(%arg0: i32) -> (i32, i32, i32) {
    %c0_i32 = arith.constant 0 : i32
    %c0_i32_0 = arith.constant 0 : i32
    %c0_i32_1 = arith.constant 0 : i32
    %c0_i32_2 = arith.constant 0 : i32
    return %c0_i32, %c0_i32_0, %c0_i32_1 : i32, i32, i32
  }
  func.func @transform_9(%arg0: i32) -> (i32, i32) {
    %c0_i32 = arith.constant 0 : i32
    %c0_i32_0 = arith.constant 0 : i32
    %c0_i32_1 = arith.constant 0 : i32
    return %c0_i32, %c0_i32_0 : i32, i32
  }
  func.func @transform_10(%arg0: i32) -> (i32, i32) {
    %c0_i32 = arith.constant 0 : i32
    %c0_i32_0 = arith.constant 0 : i32
    return %arg0, %c0_i32 : i32, i32
  }
}

</mosaic_0001>

<llo_original>
// kernel: tpu_custom_call.1
$region0: #{tpu_custom_call.1}
  #allocation0 [shape = 'u32[]', space=smem, size = 0x4, offset = 0x4, fixed_abs, tag = 'smem constant byte address 0x4 - core index']
  #allocation1 [shape = 'u32[144,128]{1,0:T(1,128)}', space=vmem, size = 0x12000, scoped, tag = 'internal scratch']
  %s0 = inlined_call_operand.vmem [shape: bf16[32,48], index: 0, kind: input, shape index: {}]
  %s1 = inlined_call_operand.vmem [shape: bf16[48,32], index: 1, kind: input, shape index: {}]
  %s2 = inlined_call_operand.vmem [shape: bf16[2,8,16], index: 2, kind: input, shape index: {}]
  %s3 = inlined_call_operand.vmem [shape: bf16[2,16,8], index: 3, kind: input, shape index: {}]
  %s4 = inlined_call_operand.vmem [shape: bf16[2,32,16], index: 4, kind: input, shape index: {}]
  %s5 = inlined_call_operand.vmem [shape: bf16[2,16,32], index: 5, kind: input, shape index: {}]
  %s6 = inlined_call_operand.vmem [shape: bf16[32,128], index: 6, kind: input, shape index: {}]
  %s7 = inlined_call_operand.vmem [shape: f32[2,8,1], index: 7, kind: input, shape index: {}]
  %s8 = inlined_call_operand.vmem [shape: f32[2,16,1], index: 8, kind: input, shape index: {}]
  %s9 = inlined_call_operand.vmem [shape: f32[16,128], index: 9, kind: input, shape index: {}]
  %s10 = inlined_call_operand.hbm [shape: f32[2,128], index: 10, kind: output, shape index: {}]
  %s11 = sld [smem:[#allocation0]]
  $region50: #{tpu_custom_call.1} parent=0
    _
  %s13 = ssub.s32 1, %s11
  %s14 = scalar_select 0, %s13, %s11
  $region1: #{tpu_custom_call.1} parent=0
    #allocation2 [shape = 'u8[1024]{0}', space=vmem, size = 0x400, scoped, tag = 'output window, operand 0, single buffered']
    #allocation3 [shape = 's32[1]{0}', space=sflag, size = 0x4, scoped, tag = 'scoped memory for tpu_custom_call.1']
    %15 = vsyncpa [#allocation3], 0
    // Predicated region
    $region2: #{tpu_custom_call.1} parent=1 // pred_check
      _
    $region3: #{tpu_custom_call.1} parent=1 // pred_check_branch
      %17 = sbr.rel (0) target = $region5
    $region4: #{tpu_custom_call.1} parent=1 // pred_region
      _
    $region5: #{tpu_custom_call.1} parent=1 // pred_fallthru
      _
    // Predicated region
    $region6: #{tpu_custom_call.1} parent=1 // pred_check
      _
    $region7: #{tpu_custom_call.1} parent=1 // pred_check_branch
      %19 = sbr.rel (0) target = $region9
    $region8: #{tpu_custom_call.1} parent=1 // pred_region
      _
    $region9: #{tpu_custom_call.1} parent=1 // pred_fallthru
      _
    // Predicated region
    $region10: #{tpu_custom_call.1} parent=1 // pred_check
      _
    $region11: #{tpu_custom_call.1} parent=1 // pred_check_branch
      %21 = sbr.rel (0) target = $region13
    $region12: #{tpu_custom_call.1} parent=1 // pred_region
      _
    $region13: #{tpu_custom_call.1} parent=1 // pred_fallthru
      _
    // Predicated region
    $region14: #{tpu_custom_call.1} parent=1 // pred_check
      _
    $region15: #{tpu_custom_call.1} parent=1 // pred_check_branch
      %23 = sbr.rel (0) target = $region17
    $region16: #{tpu_custom_call.1} parent=1 // pred_region
      _
    $region17: #{tpu_custom_call.1} parent=1 // pred_fallthru
      _
    // Predicated region
    $region18: #{tpu_custom_call.1} parent=1 // pred_check
      _
    $region19: #{tpu_custom_call.1} parent=1 // pred_check_branch
      %25 = sbr.rel (0) target = $region21
    $region20: #{tpu_custom_call.1} parent=1 // pred_region
      _
    $region21: #{tpu_custom_call.1} parent=1 // pred_fallthru
      _
    // Predicated region
    $region22: #{tpu_custom_call.1} parent=1 // pred_check
      _
    $region23: #{tpu_custom_call.1} parent=1 // pred_check_branch
      %27 = sbr.rel (0) target = $region25
    $region24: #{tpu_custom_call.1} parent=1 // pred_region
      _
    $region25: #{tpu_custom_call.1} parent=1 // pred_fallthru
      _
    // Predicated region
    $region26: #{tpu_custom_call.1} parent=1 // pred_check
      _
    $region27: #{tpu_custom_call.1} parent=1 // pred_check_branch
      %29 = sbr.rel (0) target = $region29
    $region28: #{tpu_custom_call.1} parent=1 // pred_region
      _
    $region29: #{tpu_custom_call.1} parent=1 // pred_fallthru
      _
    // Predicated region
    $region30: #{tpu_custom_call.1} parent=1 // pred_check
      _
    $region31: #{tpu_custom_call.1} parent=1 // pred_check_branch
      %31 = sbr.rel (0) target = $region33
    $region32: #{tpu_custom_call.1} parent=1 // pred_region
      _
    $region33: #{tpu_custom_call.1} parent=1 // pred_fallthru
      _
    // Predicated region
    $region34: #{tpu_custom_call.1} parent=1 // pred_check
      _
    $region35: #{tpu_custom_call.1} parent=1 // pred_check_branch
      %33 = sbr.rel (0) target = $region37
    $region36: #{tpu_custom_call.1} parent=1 // pred_region
      _
    $region37: #{tpu_custom_call.1} parent=1 // pred_fallthru
      _
    // Predicated region
    $region38: #{tpu_custom_call.1} parent=1 // pred_check
      _
    $region39: #{tpu_custom_call.1} parent=1 // pred_check_branch
      %35 = sbr.rel (0) target = $region41
    $region40: #{tpu_custom_call.1} parent=1 // pred_region
      _
    $region41: #{tpu_custom_call.1} parent=1 // pred_fallthru
      _
    %v37 = vld [vmem:[%s0] sm:$0xf]
    %v38 = vld [vmem:[%s0 + $0x4] sm:$0xf]
    %v39 = vld [vmem:[%s0 + $0x8] sm:$0xf]
    %v40 = vld [vmem:[%s0 + $0xc] sm:$0xf]
    %v41 = vld [vmem:[%s1] sm:$0xf]
    %v42 = vld [vmem:[%s1 + $0x4] sm:$0xf]
    %v43 = vld [vmem:[%s1 + $0x8] sm:$0xf]
    %v44 = vld [vmem:[%s1 + $0xc] sm:$0xf]
    %v45 = vld [vmem:[%s1 + $0x10] sm:$0xf]
    %v46 = vld [vmem:[%s1 + $0x14] sm:$0xf]
    %v47 = vld [vmem:[%s9] sm:$0x1]
    %v48 = vlaneseq
    %v49 = vshrl.u32 %v48, 7
    %v50 = vsub.s32 0, %v49
    %v51 = vrot.slane %v47, %v50
    %v56 = vunpack.c.l.b16 %v37
    %v57 = vunpack.c.l.b16 %v38
    %v58 = vunpack.c.l.b16 %v39
    %v59 = vunpack.c.l.b16 %v40
    %v60 = vpack.c.b16 %v57, %v56
    %v61 = vpack.c.b16 %v59, %v58
    %v68 = vunpack.c.l.b16 %v41
    %v69 = vunpack.c.l.b16 %v42
    %v70 = vunpack.c.l.b16 %v43
    %v71 = vunpack.c.l.b16 %v44
    %v72 = vunpack.c.l.b16 %v45
    %v73 = vunpack.c.l.b16 %v46
    %v74 = vpack.c.b16 %v69, %v68
    %v75 = vpack.c.b16 %v71, %v70
    %v76 = vpack.c.b16 %v73, %v72
    %vm80 = vcmask 392192
    %v82 = vsel %vm80, %v60, 0
    %v85 = vsel %vm80, %v61, 0
    %87 = vmatprep.subr.bf16.mxu0 0
    %88 = vmatpush1.bf16.msra.mxu0 0
    %89 = vmatprep.subr.bf16.mxu0 0
    %90 = vmatpush1.bf16.msra.mxu0 0
    %91 = vmatprep.subr.bf16.mxu0 0
    %92 = vmatpush1.bf16.msra.mxu0 0
    %93 = vmatprep.subr.bf16.mxu0 0
    %94 = vmatpush1.bf16.msra.mxu0 0
    %95 = vmatprep.subr.bf16.mxu0 0
    %96 = vmatpush1.bf16.msra.mxu0 0
    %97 = vmatprep.subr.bf16.mxu0 0
    %98 = vmatpush1.bf16.msra.mxu0 %v76
    %99 = vmatprep.subr.bf16.mxu0 0
    %100 = vmatpush1.bf16.msra.mxu0 %v75
    %101 = vmatprep.subr.bf16.mxu0 0
    %102 = vmatpush1.bf16.msra.mxu0 %v74
    %103 = vmatprep.subr.bf16.mxu0 0
    %104 = vmatpush2.bf16.msra.mxu0 0
    %105 = vmatprep.subr.bf16.mxu0 0
    %106 = vmatpush2.bf16.msra.mxu0 0
    %107 = vmatprep.subr.bf16.mxu0 0
    %108 = vmatpush2.bf16.msra.mxu0 0
    %109 = vmatprep.subr.bf16.mxu0 0
    %110 = vmatpush2.bf16.msra.mxu0 0
    %111 = vmatprep.subr.bf16.mxu0 0
    %112 = vmatpush2.bf16.msra.mxu0 0
    %113 = vmatprep.subr.bf16.mxu0 0
    %114 = vmatpush2.bf16.msra.mxu0 0
    %115 = vmatprep.subr.bf16.mxu0 0
    %116 = vmatpush2.bf16.msra.mxu0 0
    %117 = vmatprep.subr.bf16.mxu0 0
    %118 = vmatpush2.bf16.msra.mxu0 0
    %119 = vmatprep.mubr.bf16.mxu0 0
    %120 = vmatmul.mubr.bf16.gmra.mxu0 %v82
    %v121 = vpop.f32.mrf.mxu0
    %v122 = vadd.f32 %v51, %v121
    %v123 = vpop.f32.mrf.mxu0
    %v124 = vpop.f32.mrf.mxu0
    %v125 = vadd.f32 %v51, %v124
    %v126 = vpop.f32.mrf.mxu0
    %127 = vmatprep.mubr.bf16.mxu0 0
    %128 = vmatmul.mubr.bf16.gmra.mxu0 %v85
    %v129 = vpop.f32.mrf.mxu0
    %v130 = vadd.f32 %v51, %v129
    %v131 = vpop.f32.mrf.mxu0
    %v132 = vpop.f32.mrf.mxu0
    %v133 = vadd.f32 %v51, %v132
    %v134 = vpop.f32.mrf.mxu0
    %135 = vdwg.mxu0
    %v136 = vld [vmem:[%s9 + $0x1] sm:$0x1]
    %v137 = vld [vmem:[%s9 + $0x2] sm:$0x1]
    %vm138 = vcmask 261120
    %v139 = vsel %vm138, %v122, 0.0
    %140 = vadd.xlane.f32.xlu0 %v139
    %v141 = vpop.xlane.xlu0 %140
    %v142 = vsel %vm138, %v125, 0.0
    %143 = vadd.xlane.f32.xlu0 %v142
    %v144 = vpop.xlane.xlu0 %143
    %v145 = vsel %vm138, %v130, 0.0
    %146 = vadd.xlane.f32.xlu0 %v145
    %v147 = vpop.xlane.xlu0 %146
    %v148 = vsel %vm138, %v133, 0.0
    %149 = vadd.xlane.f32.xlu0 %v148
    %v150 = vpop.xlane.xlu0 %149
    %v151 = vrcp.pop 32.0
    %v152 = vmul.f32 %v141, %v151
    %v153 = vmul.f32 %v144, %v151
    %v154 = vmul.f32 %v147, %v151
    %v155 = vmul.f32 %v150, %v151
    %v156 = vsub.f32 %v122, %v152
    %v157 = vsub.f32 %v125, %v153
    %v158 = vsub.f32 %v130, %v154
    %v159 = vsub.f32 %v133, %v155
    %v160 = vmul.f32 %v156, %v156
    %v161 = vmul.f32 %v157, %v157
    %v162 = vmul.f32 %v158, %v158
    %v163 = vmul.f32 %v159, %v159
    %v164 = vsel %vm138, %v160, 0.0
    %165 = vadd.xlane.f32.xlu0 %v164
    %v166 = vpop.xlane.xlu0 %165
    %v167 = vsel %vm138, %v161, 0.0
    %168 = vadd.xlane.f32.xlu0 %v167
    %v169 = vpop.xlane.xlu0 %168
    %v170 = vsel %vm138, %v162, 0.0
    %171 = vadd.xlane.f32.xlu0 %v170
    %v172 = vpop.xlane.xlu0 %171
    %v173 = vsel %vm138, %v163, 0.0
    %174 = vadd.xlane.f32.xlu0 %v173
    %v175 = vpop.xlane.xlu0 %174
    %v176 = vmul.f32 %v166, %v151
    %v177 = vmul.f32 %v169, %v151
    %v178 = vmul.f32 %v172, %v151
    %v179 = vmul.f32 %v175, %v151
    %v180 = vadd.f32 %v176, 1e-05
    %v181 = vadd.f32 %v177, 1e-05
    %v182 = vadd.f32 %v178, 1e-05
    %v183 = vadd.f32 %v179, 1e-05
    %v184 = vrsqrt.pop %v180
    %v185 = vrsqrt.pop %v181
    %v186 = vrsqrt.pop %v182
    %v187 = vrsqrt.pop %v183
    %v188 = vmul.f32 %v156, %v184
    %v189 = vmul.f32 %v157, %v185
    %v190 = vmul.f32 %v158, %v186
    %v191 = vmul.f32 %v159, %v187
    %v192 = vlaneseq
    %v193 = vshrl.u32 %v192, 7
    %v194 = vsub.s32 0, %v193
    %v195 = vrot.slane %v136, %v194
    %v196 = vmul.f32 %v188, %v195
    %v197 = vmul.f32 %v189, %v195
    %v198 = vmul.f32 %v190, %v195
    %v199 = vmul.f32 %v191, %v195
    %v200 = vlaneseq
    %v201 = vshrl.u32 %v200, 7
    %v202 = vsub.s32 0, %v201
    %v203 = vrot.slane %v137, %v202
    %v204 = vadd.f32 %v196, %v203
    %v205 = vadd.f32 %v197, %v203
    %v206 = vadd.f32 %v198, %v203
    %v207 = vadd.f32 %v199, %v203
    %v208 = vld [vmem:[%s2] sm:$0xf]
    %v209 = vld [vmem:[%s3] sm:$0xf]
    %v210 = vld [vmem:[%s3 + $0x4] sm:$0xf]
    %v211 = vld [vmem:[%s7] sm:$0xff]
    %v212 = vld [vmem:[%s8] sm:$0xff]
    %v213 = vld [vmem:[%s8 + $0x8] sm:$0xff]
    %v214 = vpack.c.bf16 %v205, %v204
    %216 = vset.pattern.permute.xlu0 0
    %217 = vperm.xlu0 %216, %v211
    %v218 = vpop.permute.xlu0 %217
    %vm220 = vcmask 130048
    %v222 = vsel %vm220, %v208, 0
    %224 = vmatprep.subr.bf16.mxu0 0
    %225 = vmatpush1.bf16.msra.mxu0 0
    %226 = vmatprep.subr.bf16.mxu0 0
    %227 = vmatpush1.bf16.msra.mxu0 0
    %228 = vmatprep.subr.bf16.mxu0 0
    %229 = vmatpush1.bf16.msra.mxu0 0
    %230 = vmatprep.subr.bf16.mxu0 0
    %231 = vmatpush1.bf16.msra.mxu0 0
    %232 = vmatprep.subr.bf16.mxu0 0
    %233 = vmatpush1.bf16.msra.mxu0 0
    %234 = vmatprep.subr.bf16.mxu0 0
    %235 = vmatpush1.bf16.msra.mxu0 0
    %236 = vmatprep.subr.bf16.mxu0 0
    %237 = vmatpush1.bf16.msra.mxu0 0
    %238 = vmatprep.subr.bf16.mxu0 0
    %239 = vmatpush1.bf16.msra.mxu0 %v214
    %240 = vmatprep.subr.bf16.mxu0 0
    %241 = vmatpush2.bf16.msra.mxu0 0
    %242 = vmatprep.subr.bf16.mxu0 0
    %243 = vmatpush2.bf16.msra.mxu0 0
    %244 = vmatprep.subr.bf16.mxu0 0
    %245 = vmatpush2.bf16.msra.mxu0 0
    %246 = vmatprep.subr.bf16.mxu0 0
    %247 = vmatpush2.bf16.msra.mxu0 0
    %248 = vmatprep.subr.bf16.mxu0 0
    %249 = vmatpush2.bf16.msra.mxu0 0
    %250 = vmatprep.subr.bf16.mxu0 0
    %251 = vmatpush2.bf16.msra.mxu0 0
    %252 = vmatprep.subr.bf16.mxu0 0
    %253 = vmatpush2.bf16.msra.mxu0 0
    %254 = vmatprep.subr.bf16.mxu0 0
    %255 = vmatpush2.bf16.msra.mxu0 0
    %256 = vmatprep.mubr.bf16.mxu0 0
    %257 = vmatmul.mubr.bf16.gmra.mxu0 %v222
    %v258 = vpop.f32.mrf.mxu0
    %v259 = vadd.f32 %v218, %v258
    %v260 = vpop.f32.mrf.mxu0
    %v261 = vpop.f32.mrf.mxu0
    %v262 = vpop.f32.mrf.mxu0
    %263 = vdwg.mxu0
    %v264 = vmul.f32 %v259, 0.5
    %v265 = vmul.f32 %v259, 0.70710677
    %vm266 = vcmp.lt.f32.partialorder %v265, 0.0
    %v267 = vsel %vm266, -1.0, 1.0
    %v268 = vand.u32 2147483647, %v265
    %v269 = vmul.f32 %v268, 0.3275911
    %v270 = vadd.f32 %v269, 1.0
    %v271 = vrcp.pop %v270
    %v272 = vmul.f32 %v271, 1.0614054
    %v273 = vadd.f32 %v272, -1.4531521
    %v274 = vmul.f32 %v273, %v271
    %v275 = vadd.f32 %v274, 1.4214138
    %v276 = vmul.f32 %v275, %v271
    %v277 = vadd.f32 %v276, -0.28449672
    %v278 = vmul.f32 %v277, %v271
    %v279 = vadd.f32 %v278, 0.2548296
    %v280 = vmul.f32 %v279, %v271
    %v281 = vsub.f32 0.0, %v268
    %v282 = vmul.f32 %v281, %v268
    %v283 = vmul.f32 %v282, 1.442695
    %v284 = vpow.pop %v283
    %v285 = vmul.f32 %v280, %v284
    %v286 = vsub.f32 1.0, %v285
    %v287 = vmul.f32 %v267, %v286
    %v288 = vadd.f32 %v287, 1.0
    %v289 = vmul.f32 %v264, %v288
    %v290 = vpack.c.bf16 %v289, %v289
    %292 = vset.pattern.permute.xlu0 0
    %293 = vperm.xlu0 %292, %v212
    %v294 = vpop.permute.xlu0 %293
    %297 = vset.pattern.permute.xlu0 0
    %298 = vperm.xlu0 %297, %v213
    %v299 = vpop.permute.xlu0 %298
    %v303 = vunpack.c.l.b16 %v209
    %v304 = vunpack.c.l.b16 %v210
    %v305 = vpack.c.b16 %v304, %v303
    %vm306 = vcmask 64512
    %v308 = vsel %vm306, %v305, 0
    %vm310 = vcmask 1043456
    %v312 = vsel %vm310, %v290, 0
    %314 = vmatprep.subr.bf16.mxu0 0
    %315 = vmatpush1.bf16.msra.mxu0 0
    %316 = vmatprep.subr.bf16.mxu0 0
    %317 = vmatpush1.bf16.msra.mxu0 0
    %318 = vmatprep.subr.bf16.mxu0 0
    %319 = vmatpush1.bf16.msra.mxu0 0
    %320 = vmatprep.subr.bf16.mxu0 0
    %321 = vmatpush1.bf16.msra.mxu0 0
    %322 = vmatprep.subr.bf16.mxu0 0
    %323 = vmatpush1.bf16.msra.mxu0 0
    %324 = vmatprep.subr.bf16.mxu0 0
    %325 = vmatpush1.bf16.msra.mxu0 0
    %326 = vmatprep.subr.bf16.mxu0 0
    %327 = vmatpush1.bf16.msra.mxu0 0
    %328 = vmatprep.subr.bf16.mxu0 0
    %329 = vmatpush1.bf16.msra.mxu0 %v312
    %330 = vmatprep.subr.bf16.mxu0 0
    %331 = vmatpush2.bf16.msra.mxu0 0
    %332 = vmatprep.subr.bf16.mxu0 0
    %333 = vmatpush2.bf16.msra.mxu0 0
    %334 = vmatprep.subr.bf16.mxu0 0
    %335 = vmatpush2.bf16.msra.mxu0 0
    %336 = vmatprep.subr.bf16.mxu0 0
    %337 = vmatpush2.bf16.msra.mxu0 0
    %338 = vmatprep.subr.bf16.mxu0 0
    %339 = vmatpush2.bf16.msra.mxu0 0
    %340 = vmatprep.subr.bf16.mxu0 0
    %341 = vmatpush2.bf16.msra.mxu0 0
    %342 = vmatprep.subr.bf16.mxu0 0
    %343 = vmatpush2.bf16.msra.mxu0 0
    %344 = vmatprep.subr.bf16.mxu0 0
    %345 = vmatpush2.bf16.msra.mxu0 0
    %346 = vmatprep.mubr.bf16.mxu0 0
    %347 = vmatmul.mubr.bf16.gmra.mxu0 %v308
    %v348 = vpop.f32.mrf.mxu0
    %v349 = vadd.f32 %v294, %v348
    %v350 = vpop.f32.mrf.mxu0
    %v351 = vpop.f32.mrf.mxu0
    %v352 = vadd.f32 %v299, %v351
    %v353 = vpop.f32.mrf.mxu0
    %354 = vdwg.mxu0
    %v355 = vpack.c.bf16 %v207, %v206
    %356 = vmatprep.subr.bf16.mxu0 0
    %357 = vmatpush1.bf16.msra.mxu0 0
    %358 = vmatprep.subr.bf16.mxu0 0
    %359 = vmatpush1.bf16.msra.mxu0 0
    %360 = vmatprep.subr.bf16.mxu0 0
    %361 = vmatpush1.bf16.msra.mxu0 0
    %362 = vmatprep.subr.bf16.mxu0 0
    %363 = vmatpush1.bf16.msra.mxu0 0
    %364 = vmatprep.subr.bf16.mxu0 0
    %365 = vmatpush1.bf16.msra.mxu0 0
    %366 = vmatprep.subr.bf16.mxu0 0
    %367 = vmatpush1.bf16.msra.mxu0 0
    %368 = vmatprep.subr.bf16.mxu0 0
    %369 = vmatpush1.bf16.msra.mxu0 0
    %370 = vmatprep.subr.bf16.mxu0 0
    %371 = vmatpush1.bf16.msra.mxu0 %v355
    %372 = vmatprep.subr.bf16.mxu0 0
    %373 = vmatpush2.bf16.msra.mxu0 0
    %374 = vmatprep.subr.bf16.mxu0 0
    %375 = vmatpush2.bf16.msra.mxu0 0
    %376 = vmatprep.subr.bf16.mxu0 0
    %377 = vmatpush2.bf16.msra.mxu0 0
    %378 = vmatprep.subr.bf16.mxu0 0
    %379 = vmatpush2.bf16.msra.mxu0 0
    %380 = vmatprep.subr.bf16.mxu0 0
    %381 = vmatpush2.bf16.msra.mxu0 0
    %382 = vmatprep.subr.bf16.mxu0 0
    %383 = vmatpush2.bf16.msra.mxu0 0
    %384 = vmatprep.subr.bf16.mxu0 0
    %385 = vmatpush2.bf16.msra.mxu0 0
    %386 = vmatprep.subr.bf16.mxu0 0
    %387 = vmatpush2.bf16.msra.mxu0 0
    %388 = vmatprep.mubr.bf16.mxu0 0
    %389 = vmatmul.mubr.bf16.gmra.mxu0 %v222
    %v390 = vpop.f32.mrf.mxu0
    %v391 = vadd.f32 %v218, %v390
    %v392 = vpop.f32.mrf.mxu0
    %v393 = vpop.f32.mrf.mxu0
    %v394 = vpop.f32.mrf.mxu0
    %395 = vdwg.mxu0
    %v396 = vmul.f32 %v391, 0.5
    %v397 = vmul.f32 %v391, 0.70710677
    %vm398 = vcmp.lt.f32.partialorder %v397, 0.0
    %v399 = vsel %vm398, -1.0, 1.0
    %v400 = vand.u32 2147483647, %v397
    %v401 = vmul.f32 %v400, 0.3275911
    %v402 = vadd.f32 %v401, 1.0
    %v403 = vrcp.pop %v402
    %v404 = vmul.f32 %v403, 1.0614054
    %v405 = vadd.f32 %v404, -1.4531521
    %v406 = vmul.f32 %v405, %v403
    %v407 = vadd.f32 %v406, 1.4214138
    %v408 = vmul.f32 %v407, %v403
    %v409 = vadd.f32 %v408, -0.28449672
    %v410 = vmul.f32 %v409, %v403
    %v411 = vadd.f32 %v410, 0.2548296
    %v412 = vmul.f32 %v411, %v403
    %v413 = vsub.f32 0.0, %v400
    %v414 = vmul.f32 %v413, %v400
    %v415 = vmul.f32 %v414, 1.442695
    %v416 = vpow.pop %v415
    %v417 = vmul.f32 %v412, %v416
    %v418 = vsub.f32 1.0, %v417
    %v419 = vmul.f32 %v399, %v418
    %v420 = vadd.f32 %v419, 1.0
    %v421 = vmul.f32 %v396, %v420
    %v422 = vpack.c.bf16 %v421, %v421
    %v424 = vsel %vm310, %v422, 0
    %426 = vmatprep.subr.bf16.mxu0 0
    %427 = vmatpush1.bf16.msra.mxu0 0
    %428 = vmatprep.subr.bf16.mxu0 0
    %429 = vmatpush1.bf16.msra.mxu0 0
    %430 = vmatprep.subr.bf16.mxu0 0
    %431 = vmatpush1.bf16.msra.mxu0 0
    %432 = vmatprep.subr.bf16.mxu0 0
    %433 = vmatpush1.bf16.msra.mxu0 0
    %434 = vmatprep.subr.bf16.mxu0 0
    %435 = vmatpush1.bf16.msra.mxu0 0
    %436 = vmatprep.subr.bf16.mxu0 0
    %437 = vmatpush1.bf16.msra.mxu0 0
    %438 = vmatprep.subr.bf16.mxu0 0
    %439 = vmatpush1.bf16.msra.mxu0 0
    %440 = vmatprep.subr.bf16.mxu0 0
    %441 = vmatpush1.bf16.msra.mxu0 %v424
    %442 = vmatprep.subr.bf16.mxu0 0
    %443 = vmatpush2.bf16.msra.mxu0 0
    %444 = vmatprep.subr.bf16.mxu0 0
    %445 = vmatpush2.bf16.msra.mxu0 0
    %446 = vmatprep.subr.bf16.mxu0 0
    %447 = vmatpush2.bf16.msra.mxu0 0
    %448 = vmatprep.subr.bf16.mxu0 0
    %449 = vmatpush2.bf16.msra.mxu0 0
    %450 = vmatprep.subr.bf16.mxu0 0
    %451 = vmatpush2.bf16.msra.mxu0 0
    %452 = vmatprep.subr.bf16.mxu0 0
    %453 = vmatpush2.bf16.msra.mxu0 0
    %454 = vmatprep.subr.bf16.mxu0 0
    %455 = vmatpush2.bf16.msra.mxu0 0
    %456 = vmatprep.subr.bf16.mxu0 0
    %457 = vmatpush2.bf16.msra.mxu0 0
    %458 = vmatprep.mubr.bf16.mxu0 0
    %459 = vmatmul.mubr.bf16.gmra.mxu0 %v308
    %v460 = vpop.f32.mrf.mxu0
    %v461 = vadd.f32 %v294, %v460
    %v462 = vpop.f32.mrf.mxu0
    %v463 = vpop.f32.mrf.mxu0
    %v464 = vadd.f32 %v299, %v463
    %v465 = vpop.f32.mrf.mxu0
    %466 = vdwg.mxu0
    %v467 = vmul.f32 %v349, 2.0
    %v468 = vmul.f32 %v352, 2.0
    %v469 = vmul.f32 %v461, 2.0
    %v470 = vmul.f32 %v464, 2.0
    %v471 = vadd.f32 %v122, %v467
    %v472 = vadd.f32 %v125, %v468
    %v473 = vadd.f32 %v130, %v469
    %v474 = vadd.f32 %v133, %v470
    %v475 = vld [vmem:[%s9 + $0x3] sm:$0x1]
    %v476 = vld [vmem:[%s9 + $0x4] sm:$0x1]
    %v477 = vsel %vm138, %v471, 0.0
    %478 = vadd.xlane.f32.xlu0 %v477
    %v479 = vpop.xlane.xlu0 %478
    %v480 = vsel %vm138, %v472, 0.0
    %481 = vadd.xlane.f32.xlu0 %v480
    %v482 = vpop.xlane.xlu0 %481
    %v483 = vsel %vm138, %v473, 0.0
    %484 = vadd.xlane.f32.xlu0 %v483
    %v485 = vpop.xlane.xlu0 %484
    %v486 = vsel %vm138, %v474, 0.0
    %487 = vadd.xlane.f32.xlu0 %v486
    %v488 = vpop.xlane.xlu0 %487
    %v489 = vmul.f32 %v479, %v151
    %v490 = vmul.f32 %v482, %v151
    %v491 = vmul.f32 %v485, %v151
    %v492 = vmul.f32 %v488, %v151
    %v493 = vsub.f32 %v471, %v489
    %v494 = vsub.f32 %v472, %v490
    %v495 = vsub.f32 %v473, %v491
    %v496 = vsub.f32 %v474, %v492
    %v497 = vmul.f32 %v493, %v493
    %v498 = vmul.f32 %v494, %v494
    %v499 = vmul.f32 %v495, %v495
    %v500 = vmul.f32 %v496, %v496
    %v501 = vsel %vm138, %v497, 0.0
    %502 = vadd.xlane.f32.xlu0 %v501
    %v503 = vpop.xlane.xlu0 %502
    %v504 = vsel %vm138, %v498, 0.0
    %505 = vadd.xlane.f32.xlu0 %v504
    %v506 = vpop.xlane.xlu0 %505
    %v507 = vsel %vm138, %v499, 0.0
    %508 = vadd.xlane.f32.xlu0 %v507
    %v509 = vpop.xlane.xlu0 %508
    %v510 = vsel %vm138, %v500, 0.0
    %511 = vadd.xlane.f32.xlu0 %v510
    %v512 = vpop.xlane.xlu0 %511
    %v513 = vmul.f32 %v503, %v151
    %v514 = vmul.f32 %v506, %v151
    %v515 = vmul.f32 %v509, %v151
    %v516 = vmul.f32 %v512, %v151
    %v517 = vadd.f32 %v513, 1e-05
    %v518 = vadd.f32 %v514, 1e-05
    %v519 = vadd.f32 %v515, 1e-05
    %v520 = vadd.f32 %v516, 1e-05
    %v521 = vrsqrt.pop %v517
    %v522 = vrsqrt.pop %v518
    %v523 = vrsqrt.pop %v519
    %v524 = vrsqrt.pop %v520
    %v525 = vmul.f32 %v493, %v521
    %v526 = vmul.f32 %v494, %v522
    %v527 = vmul.f32 %v495, %v523
    %v528 = vmul.f32 %v496, %v524
    %v529 = vlaneseq
    %v530 = vshrl.u32 %v529, 7
    %v531 = vsub.s32 0, %v530
    %v532 = vrot.slane %v475, %v531
    %v533 = vmul.f32 %v525, %v532
    %v534 = vmul.f32 %v526, %v532
    %v535 = vmul.f32 %v527, %v532
    %v536 = vmul.f32 %v528, %v532
    %v537 = vlaneseq
    %v538 = vshrl.u32 %v537, 7
    %v539 = vsub.s32 0, %v538
    %v540 = vrot.slane %v476, %v539
    %v541 = vadd.f32 %v533, %v540
    %v542 = vadd.f32 %v534, %v540
    %v543 = vadd.f32 %v535, %v540
    %v544 = vadd.f32 %v536, %v540
    %v545 = vld [vmem:[%s4] sm:$0xf]
    %v546 = vld [vmem:[%s4 + $0x4] sm:$0xf]
    %v547 = vld [vmem:[%s4 + $0x8] sm:$0xf]
    %v548 = vld [vmem:[%s4 + $0xc] sm:$0xf]
    %v549 = vpack.c.bf16 %v542, %v541
    %v550 = vpack.c.bf16 %v544, %v543
    %v551 = vld [vmem:[%s9 + $0x5] sm:$0x1]
    %v552 = vlaneseq
    %v553 = vshrl.u32 %v552, 7
    %v554 = vsub.s32 0, %v553
    %v555 = vrot.slane %v551, %v554
    %v560 = vunpack.c.l.b16 %v545
    %v561 = vunpack.c.l.b16 %v546
    %v562 = vunpack.c.l.b16 %v547
    %v563 = vunpack.c.l.b16 %v548
    %v564 = vpack.c.b16 %v561, %v560
    %v565 = vpack.c.b16 %v563, %v562
    %v569 = vsel %vm138, %v549, 0
    %v572 = vsel %vm138, %v550, 0
    %574 = vmatprep.subr.bf16.mxu0 0
    %575 = vmatpush1.bf16.msra.mxu0 0
    %576 = vmatprep.subr.bf16.mxu0 0
    %577 = vmatpush1.bf16.msra.mxu0 0
    %578 = vmatprep.subr.bf16.mxu0 0
    %579 = vmatpush1.bf16.msra.mxu0 0
    %580 = vmatprep.subr.bf16.mxu0 0
    %581 = vmatpush1.bf16.msra.mxu0 0
    %582 = vmatprep.subr.bf16.mxu0 0
    %583 = vmatpush1.bf16.msra.mxu0 0
    %584 = vmatprep.subr.bf16.mxu0 0
    %585 = vmatpush1.bf16.msra.mxu0 0
    %586 = vmatprep.subr.bf16.mxu0 0
    %587 = vmatpush1.bf16.msra.mxu0 %v565
    %588 = vmatprep.subr.bf16.mxu0 0
    %589 = vmatpush1.bf16.msra.mxu0 %v564
    %590 = vmatprep.subr.bf16.mxu0 0
    %591 = vmatpush2.bf16.msra.mxu0 0
    %592 = vmatprep.subr.bf16.mxu0 0
    %593 = vmatpush2.bf16.msra.mxu0 0
    %594 = vmatprep.subr.bf16.mxu0 0
    %595 = vmatpush2.bf16.msra.mxu0 0
    %596 = vmatprep.subr.bf16.mxu0 0
    %597 = vmatpush2.bf16.msra.mxu0 0
    %598 = vmatprep.subr.bf16.mxu0 0
    %599 = vmatpush2.bf16.msra.mxu0 0
    %600 = vmatprep.subr.bf16.mxu0 0
    %601 = vmatpush2.bf16.msra.mxu0 0
    %602 = vmatprep.subr.bf16.mxu0 0
    %603 = vmatpush2.bf16.msra.mxu0 0
    %604 = vmatprep.subr.bf16.mxu0 0
    %605 = vmatpush2.bf16.msra.mxu0 0
    %606 = vmatprep.mubr.bf16.mxu0 0
    %607 = vmatmul.mubr.bf16.gmra.mxu0 %v569
    %v608 = vpop.f32.mrf.mxu0
    %v609 = vadd.f32 %v555, %v608
    %v610 = vpop.f32.mrf.mxu0
    %v611 = vpop.f32.mrf.mxu0
    %v612 = vadd.f32 %v555, %v611
    %v613 = vpop.f32.mrf.mxu0
    %614 = vmatprep.mubr.bf16.mxu0 0
    %615 = vmatmul.mubr.bf16.gmra.mxu0 %v572
    %v616 = vpop.f32.mrf.mxu0
    %v617 = vadd.f32 %v555, %v616
    %v618 = vpop.f32.mrf.mxu0
    %v619 = vpop.f32.mrf.mxu0
    %v620 = vadd.f32 %v555, %v619
    %v621 = vpop.f32.mrf.mxu0
    %622 = vdwg.mxu0
    %v623 = vmul.f32 %v609, 0.5
    %v624 = vmul.f32 %v612, 0.5
    %v625 = vmul.f32 %v617, 0.5
    %v626 = vmul.f32 %v620, 0.5
    %v627 = vmul.f32 %v609, 0.70710677
    %v628 = vmul.f32 %v612, 0.70710677
    %v629 = vmul.f32 %v617, 0.70710677
    %v630 = vmul.f32 %v620, 0.70710677
    %vm631 = vcmp.lt.f32.partialorder %v627, 0.0
    %vm632 = vcmp.lt.f32.partialorder %v628, 0.0
    %vm633 = vcmp.lt.f32.partialorder %v629, 0.0
    %vm634 = vcmp.lt.f32.partialorder %v630, 0.0
    %v635 = vsel %vm631, -1.0, 1.0
    %v636 = vsel %vm632, -1.0, 1.0
    %v637 = vsel %vm633, -1.0, 1.0
    %v638 = vsel %vm634, -1.0, 1.0
    %v639 = vand.u32 2147483647, %v627
    %v640 = vand.u32 2147483647, %v628
    %v641 = vand.u32 2147483647, %v629
    %v642 = vand.u32 2147483647, %v630
    %v643 = vmul.f32 %v639, 0.3275911
    %v644 = vmul.f32 %v640, 0.3275911
    %v645 = vmul.f32 %v641, 0.3275911
    %v646 = vmul.f32 %v642, 0.3275911
    %v647 = vadd.f32 %v643, 1.0
    %v648 = vadd.f32 %v644, 1.0
    %v649 = vadd.f32 %v645, 1.0
    %v650 = vadd.f32 %v646, 1.0
    %v651 = vrcp.pop %v647
    %v652 = vrcp.pop %v648
    %v653 = vrcp.pop %v649
    %v654 = vrcp.pop %v650
    %v655 = vmul.f32 %v651, 1.0614054
    %v656 = vmul.f32 %v652, 1.0614054
    %v657 = vmul.f32 %v653, 1.0614054
    %v658 = vmul.f32 %v654, 1.0614054
    %v659 = vadd.f32 %v655, -1.4531521
    %v660 = vadd.f32 %v656, -1.4531521
    %v661 = vadd.f32 %v657, -1.4531521
    %v662 = vadd.f32 %v658, -1.4531521
    %v663 = vmul.f32 %v659, %v651
    %v664 = vmul.f32 %v660, %v652
    %v665 = vmul.f32 %v661, %v653
    %v666 = vmul.f32 %v662, %v654
    %v667 = vadd.f32 %v663, 1.4214138
    %v668 = vadd.f32 %v664, 1.4214138
    %v669 = vadd.f32 %v665, 1.4214138
    %v670 = vadd.f32 %v666, 1.4214138
    %v671 = vmul.f32 %v667, %v651
    %v672 = vmul.f32 %v668, %v652
    %v673 = vmul.f32 %v669, %v653
    %v674 = vmul.f32 %v670, %v654
    %v675 = vadd.f32 %v671, -0.28449672
    %v676 = vadd.f32 %v672, -0.28449672
    %v677 = vadd.f32 %v673, -0.28449672
    %v678 = vadd.f32 %v674, -0.28449672
    %v679 = vmul.f32 %v675, %v651
    %v680 = vmul.f32 %v676, %v652
    %v681 = vmul.f32 %v677, %v653
    %v682 = vmul.f32 %v678, %v654
    %v683 = vadd.f32 %v679, 0.2548296
    %v684 = vadd.f32 %v680, 0.2548296
    %v685 = vadd.f32 %v681, 0.2548296
    %v686 = vadd.f32 %v682, 0.2548296
    %v687 = vmul.f32 %v683, %v651
    %v688 = vmul.f32 %v684, %v652
    %v689 = vmul.f32 %v685, %v653
    %v690 = vmul.f32 %v686, %v654
    %v691 = vsub.f32 0.0, %v639
    %v692 = vsub.f32 0.0, %v640
    %v693 = vsub.f32 0.0, %v641
    %v694 = vsub.f32 0.0, %v642
    %v695 = vmul.f32 %v691, %v639
    %v696 = vmul.f32 %v692, %v640
    %v697 = vmul.f32 %v693, %v641
    %v698 = vmul.f32 %v694, %v642
    %v699 = vmul.f32 %v695, 1.442695
    %v700 = vpow.pop %v699
    %v701 = vmul.f32 %v696, 1.442695
    %v702 = vpow.pop %v701
    %v703 = vmul.f32 %v697, 1.442695
    %v704 = vpow.pop %v703
    %v705 = vmul.f32 %v698, 1.442695
    %v706 = vpow.pop %v705
    %v707 = vmul.f32 %v687, %v700
    %v708 = vmul.f32 %v688, %v702
    %v709 = vmul.f32 %v689, %v704
    %v710 = vmul.f32 %v690, %v706
    %v711 = vsub.f32 1.0, %v707
    %v712 = vsub.f32 1.0, %v708
    %v713 = vsub.f32 1.0, %v709
    %v714 = vsub.f32 1.0, %v710
    %v715 = vmul.f32 %v635, %v711
    %v716 = vmul.f32 %v636, %v712
    %v717 = vmul.f32 %v637, %v713
    %v718 = vmul.f32 %v638, %v714
    %v719 = vadd.f32 %v715, 1.0
    %v720 = vadd.f32 %v716, 1.0
    %v721 = vadd.f32 %v717, 1.0
    %v722 = vadd.f32 %v718, 1.0
    %v723 = vmul.f32 %v623, %v719
    %v724 = vmul.f32 %v624, %v720
    %v725 = vmul.f32 %v625, %v721
    %v726 = vmul.f32 %v626, %v722
    %v727 = vld [vmem:[%s5] sm:$0xf]
    %v728 = vld [vmem:[%s5 + $0x4] sm:$0xf]
    %v729 = vpack.c.bf16 %v724, %v723
    %v730 = vpack.c.bf16 %v726, %v725
    %v731 = vld [vmem:[%s9 + $0x6] sm:$0x1]
    %v732 = vlaneseq
    %v733 = vshrl.u32 %v732, 7
    %v734 = vsub.s32 0, %v733
    %v735 = vrot.slane %v731, %v734
    %v738 = vunpack.c.l.b16 %v727
    %v739 = vunpack.c.l.b16 %v728
    %v740 = vpack.c.b16 %v739, %v738
    %v743 = vsel %vm220, %v729, 0
    %v746 = vsel %vm220, %v730, 0
    %748 = vmatprep.subr.bf16.mxu0 0
    %749 = vmatpush1.bf16.msra.mxu0 0
    %750 = vmatprep.subr.bf16.mxu0 0
    %751 = vmatpush1.bf16.msra.mxu0 0
    %752 = vmatprep.subr.bf16.mxu0 0
    %753 = vmatpush1.bf16.msra.mxu0 0
    %754 = vmatprep.subr.bf16.mxu0 0
    %755 = vmatpush1.bf16.msra.mxu0 0
    %756 = vmatprep.subr.bf16.mxu0 0
    %757 = vmatpush1.bf16.msra.mxu0 0
    %758 = vmatprep.subr.bf16.mxu0 0
    %759 = vmatpush1.bf16.msra.mxu0 0
    %760 = vmatprep.subr.bf16.mxu0 0
    %761 = vmatpush1.bf16.msra.mxu0 0
    %762 = vmatprep.subr.bf16.mxu0 0
    %763 = vmatpush1.bf16.msra.mxu0 %v740
    %764 = vmatprep.subr.bf16.mxu0 0
    %765 = vmatpush2.bf16.msra.mxu0 0
    %766 = vmatprep.subr.bf16.mxu0 0
    %767 = vmatpush2.bf16.msra.mxu0 0
    %768 = vmatprep.subr.bf16.mxu0 0
    %769 = vmatpush2.bf16.msra.mxu0 0
    %770 = vmatprep.subr.bf16.mxu0 0
    %771 = vmatpush2.bf16.msra.mxu0 0
    %772 = vmatprep.subr.bf16.mxu0 0
    %773 = vmatpush2.bf16.msra.mxu0 0
    %774 = vmatprep.subr.bf16.mxu0 0
    %775 = vmatpush2.bf16.msra.mxu0 0
    %776 = vmatprep.subr.bf16.mxu0 0
    %777 = vmatpush2.bf16.msra.mxu0 0
    %778 = vmatprep.subr.bf16.mxu0 0
    %779 = vmatpush2.bf16.msra.mxu0 0
    %780 = vmatprep.mubr.bf16.mxu0 0
    %781 = vmatmul.mubr.bf16.gmra.mxu0 %v743
    %v782 = vpop.f32.mrf.mxu0
    %v783 = vadd.f32 %v735, %v782
    %v784 = vpop.f32.mrf.mxu0
    %v785 = vpop.f32.mrf.mxu0
    %v786 = vadd.f32 %v735, %v785
    %v787 = vpop.f32.mrf.mxu0
    %788 = vmatprep.mubr.bf16.mxu0 0
    %789 = vmatmul.mubr.bf16.gmra.mxu0 %v746
    %v790 = vpop.f32.mrf.mxu0
    %v791 = vadd.f32 %v735, %v790
    %v792 = vpop.f32.mrf.mxu0
    %v793 = vpop.f32.mrf.mxu0
    %v794 = vadd.f32 %v735, %v793
    %v795 = vpop.f32.mrf.mxu0
    %796 = vdwg.mxu0
    %v797 = vmul.f32 %v783, 2.0
    %v798 = vmul.f32 %v786, 2.0
    %v799 = vmul.f32 %v791, 2.0
    %v800 = vmul.f32 %v794, 2.0
    %v801 = vadd.f32 %v471, %v797
    %v802 = vadd.f32 %v472, %v798
    %v803 = vadd.f32 %v473, %v799
    %v804 = vadd.f32 %v474, %v800
    %v805 = vld [vmem:[%s9 + $0x7] sm:$0x1]
    %v806 = vld [vmem:[%s9 + $0x8] sm:$0x1]
    %v807 = vsel %vm138, %v801, 0.0
    %808 = vadd.xlane.f32.xlu0 %v807
    %v809 = vpop.xlane.xlu0 %808
    %v810 = vsel %vm138, %v802, 0.0
    %811 = vadd.xlane.f32.xlu0 %v810
    %v812 = vpop.xlane.xlu0 %811
    %v813 = vsel %vm138, %v803, 0.0
    %814 = vadd.xlane.f32.xlu0 %v813
    %v815 = vpop.xlane.xlu0 %814
    %v816 = vsel %vm138, %v804, 0.0
    %817 = vadd.xlane.f32.xlu0 %v816
    %v818 = vpop.xlane.xlu0 %817
    %v819 = vmul.f32 %v809, %v151
    %v820 = vmul.f32 %v812, %v151
    %v821 = vmul.f32 %v815, %v151
    %v822 = vmul.f32 %v818, %v151
    %v823 = vsub.f32 %v801, %v819
    %v824 = vsub.f32 %v802, %v820
    %v825 = vsub.f32 %v803, %v821
    %v826 = vsub.f32 %v804, %v822
    %v827 = vmul.f32 %v823, %v823
    %v828 = vmul.f32 %v824, %v824
    %v829 = vmul.f32 %v825, %v825
    %v830 = vmul.f32 %v826, %v826
    %v831 = vsel %vm138, %v827, 0.0
    %832 = vadd.xlane.f32.xlu0 %v831
    %v833 = vpop.xlane.xlu0 %832
    %v834 = vsel %vm138, %v828, 0.0
    %835 = vadd.xlane.f32.xlu0 %v834
    %v836 = vpop.xlane.xlu0 %835
    %v837 = vsel %vm138, %v829, 0.0
    %838 = vadd.xlane.f32.xlu0 %v837
    %v839 = vpop.xlane.xlu0 %838
    %v840 = vsel %vm138, %v830, 0.0
    %841 = vadd.xlane.f32.xlu0 %v840
    %v842 = vpop.xlane.xlu0 %841
    %v843 = vmul.f32 %v833, %v151
    %v844 = vmul.f32 %v836, %v151
    %v845 = vmul.f32 %v839, %v151
    %v846 = vmul.f32 %v842, %v151
    %v847 = vadd.f32 %v843, 1e-05
    %v848 = vadd.f32 %v844, 1e-05
    %v849 = vadd.f32 %v845, 1e-05
    %v850 = vadd.f32 %v846, 1e-05
    %v851 = vrsqrt.pop %v847
    %v852 = vrsqrt.pop %v848
    %v853 = vrsqrt.pop %v849
    %v854 = vrsqrt.pop %v850
    %v855 = vmul.f32 %v823, %v851
    %v856 = vmul.f32 %v824, %v852
    %v857 = vmul.f32 %v825, %v853
    %v858 = vmul.f32 %v826, %v854
    %v859 = vlaneseq
    %v860 = vshrl.u32 %v859, 7
    %v861 = vsub.s32 0, %v860
    %v862 = vrot.slane %v805, %v861
    %v863 = vmul.f32 %v855, %v862
    %v864 = vmul.f32 %v856, %v862
    %v865 = vmul.f32 %v857, %v862
    %v866 = vmul.f32 %v858, %v862
    %v867 = vlaneseq
    %v868 = vshrl.u32 %v867, 7
    %v869 = vsub.s32 0, %v868
    %v870 = vrot.slane %v806, %v869
    %v871 = vadd.f32 %v863, %v870
    %v872 = vadd.f32 %v864, %v870
    %v873 = vadd.f32 %v865, %v870
    %v874 = vadd.f32 %v866, %v870
    %s875 = scalar_lea.vmem %s2, 4
    %v876 = vld [vmem:[%s875] sm:$0xf]
    %s877 = scalar_lea.vmem %s3, 8
    %v878 = vld [vmem:[%s877] sm:$0xf]
    %v879 = vld [vmem:[%s877 + $0x4] sm:$0xf]
    %s880 = scalar_lea.vmem %s7, 8
    %v881 = vld [vmem:[%s880] sm:$0xff]
    %s882 = scalar_lea.vmem %s8, 16
    %v883 = vld [vmem:[%s882] sm:$0xff]
    %v884 = vld [vmem:[%s882 + $0x8] sm:$0xff]
    %v885 = vpack.c.bf16 %v872, %v871
    %887 = vset.pattern.permute.xlu0 0
    %888 = vperm.xlu0 %887, %v881
    %v889 = vpop.permute.xlu0 %888
    %v892 = vsel %vm220, %v876, 0
    %894 = vmatprep.subr.bf16.mxu0 0
    %895 = vmatpush1.bf16.msra.mxu0 0
    %896 = vmatprep.subr.bf16.mxu0 0
    %897 = vmatpush1.bf16.msra.mxu0 0
    %898 = vmatprep.subr.bf16.mxu0 0
    %899 = vmatpush1.bf16.msra.mxu0 0
    %900 = vmatprep.subr.bf16.mxu0 0
    %901 = vmatpush1.bf16.msra.mxu0 0
    %902 = vmatprep.subr.bf16.mxu0 0
    %903 = vmatpush1.bf16.msra.mxu0 0
    %904 = vmatprep.subr.bf16.mxu0 0
    %905 = vmatpush1.bf16.msra.mxu0 0
    %906 = vmatprep.subr.bf16.mxu0 0
    %907 = vmatpush1.bf16.msra.mxu0 0
    %908 = vmatprep.subr.bf16.mxu0 0
    %909 = vmatpush1.bf16.msra.mxu0 %v885
    %910 = vmatprep.subr.bf16.mxu0 0
    %911 = vmatpush2.bf16.msra.mxu0 0
    %912 = vmatprep.subr.bf16.mxu0 0
    %913 = vmatpush2.bf16.msra.mxu0 0
    %914 = vmatprep.subr.bf16.mxu0 0
    %915 = vmatpush2.bf16.msra.mxu0 0
    %916 = vmatprep.subr.bf16.mxu0 0
    %917 = vmatpush2.bf16.msra.mxu0 0
    %918 = vmatprep.subr.bf16.mxu0 0
    %919 = vmatpush2.bf16.msra.mxu0 0
    %920 = vmatprep.subr.bf16.mxu0 0
    %921 = vmatpush2.bf16.msra.mxu0 0
    %922 = vmatprep.subr.bf16.mxu0 0
    %923 = vmatpush2.bf16.msra.mxu0 0
    %924 = vmatprep.subr.bf16.mxu0 0
    %925 = vmatpush2.bf16.msra.mxu0 0
    %926 = vmatprep.mubr.bf16.mxu0 0
    %927 = vmatmul.mubr.bf16.gmra.mxu0 %v892
    %v928 = vpop.f32.mrf.mxu0
    %v929 = vadd.f32 %v889, %v928
    %v930 = vpop.f32.mrf.mxu0
    %v931 = vpop.f32.mrf.mxu0
    %v932 = vpop.f32.mrf.mxu0
    %933 = vdwg.mxu0
    %v934 = vmul.f32 %v929, 0.5
    %v935 = vmul.f32 %v929, 0.70710677
    %vm936 = vcmp.lt.f32.partialorder %v935, 0.0
    %v937 = vsel %vm936, -1.0, 1.0
    %v938 = vand.u32 2147483647, %v935
    %v939 = vmul.f32 %v938, 0.3275911
    %v940 = vadd.f32 %v939, 1.0
    %v941 = vrcp.pop %v940
    %v942 = vmul.f32 %v941, 1.0614054
    %v943 = vadd.f32 %v942, -1.4531521
    %v944 = vmul.f32 %v943, %v941
    %v945 = vadd.f32 %v944, 1.4214138
    %v946 = vmul.f32 %v945, %v941
    %v947 = vadd.f32 %v946, -0.28449672
    %v948 = vmul.f32 %v947, %v941
    %v949 = vadd.f32 %v948, 0.2548296
    %v950 = vmul.f32 %v949, %v941
    %v951 = vsub.f32 0.0, %v938
    %v952 = vmul.f32 %v951, %v938
    %v953 = vmul.f32 %v952, 1.442695
    %v954 = vpow.pop %v953
    %v955 = vmul.f32 %v950, %v954
    %v956 = vsub.f32 1.0, %v955
    %v957 = vmul.f32 %v937, %v956
    %v958 = vadd.f32 %v957, 1.0
    %v959 = vmul.f32 %v934, %v958
    %v960 = vpack.c.bf16 %v959, %v959
    %962 = vset.pattern.permute.xlu0 0
    %963 = vperm.xlu0 %962, %v883
    %v964 = vpop.permute.xlu0 %963
    %967 = vset.pattern.permute.xlu0 0
    %968 = vperm.xlu0 %967, %v884
    %v969 = vpop.permute.xlu0 %968
    %v973 = vunpack.c.l.b16 %v878
    %v974 = vunpack.c.l.b16 %v879
    %v975 = vpack.c.b16 %v974, %v973
    %v977 = vsel %vm306, %v975, 0
    %v980 = vsel %vm310, %v960, 0
    %982 = vmatprep.subr.bf16.mxu0 0
    %983 = vmatpush1.bf16.msra.mxu0 0
    %984 = vmatprep.subr.bf16.mxu0 0
    %985 = vmatpush1.bf16.msra.mxu0 0
    %986 = vmatprep.subr.bf16.mxu0 0
    %987 = vmatpush1.bf16.msra.mxu0 0
    %988 = vmatprep.subr.bf16.mxu0 0
    %989 = vmatpush1.bf16.msra.mxu0 0
    %990 = vmatprep.subr.bf16.mxu0 0
    %991 = vmatpush1.bf16.msra.mxu0 0
    %992 = vmatprep.subr.bf16.mxu0 0
    %993 = vmatpush1.bf16.msra.mxu0 0
    %994 = vmatprep.subr.bf16.mxu0 0
    %995 = vmatpush1.bf16.msra.mxu0 0
    %996 = vmatprep.subr.bf16.mxu0 0
    %997 = vmatpush1.bf16.msra.mxu0 %v980
    %998 = vmatprep.subr.bf16.mxu0 0
    %999 = vmatpush2.bf16.msra.mxu0 0
    %1000 = vmatprep.subr.bf16.mxu0 0
    %1001 = vmatpush2.bf16.msra.mxu0 0
    %1002 = vmatprep.subr.bf16.mxu0 0
    %1003 = vmatpush2.bf16.msra.mxu0 0
    %1004 = vmatprep.subr.bf16.mxu0 0
    %1005 = vmatpush2.bf16.msra.mxu0 0
    %1006 = vmatprep.subr.bf16.mxu0 0
    %1007 = vmatpush2.bf16.msra.mxu0 0
    %1008 = vmatprep.subr.bf16.mxu0 0
    %1009 = vmatpush2.bf16.msra.mxu0 0
    %1010 = vmatprep.subr.bf16.mxu0 0
    %1011 = vmatpush2.bf16.msra.mxu0 0
    %1012 = vmatprep.subr.bf16.mxu0 0
    %1013 = vmatpush2.bf16.msra.mxu0 0
    %1014 = vmatprep.mubr.bf16.mxu0 0
    %1015 = vmatmul.mubr.bf16.gmra.mxu0 %v977
    %v1016 = vpop.f32.mrf.mxu0
    %v1017 = vadd.f32 %v964, %v1016
    %v1018 = vpop.f32.mrf.mxu0
    %v1019 = vpop.f32.mrf.mxu0
    %v1020 = vadd.f32 %v969, %v1019
    %v1021 = vpop.f32.mrf.mxu0
    %1022 = vdwg.mxu0
    %v1023 = vpack.c.bf16 %v874, %v873
    %1024 = vmatprep.subr.bf16.mxu0 0
    %1025 = vmatpush1.bf16.msra.mxu0 0
    %1026 = vmatprep.subr.bf16.mxu0 0
    %1027 = vmatpush1.bf16.msra.mxu0 0
    %1028 = vmatprep.subr.bf16.mxu0 0
    %1029 = vmatpush1.bf16.msra.mxu0 0
    %1030 = vmatprep.subr.bf16.mxu0 0
    %1031 = vmatpush1.bf16.msra.mxu0 0
    %1032 = vmatprep.subr.bf16.mxu0 0
    %1033 = vmatpush1.bf16.msra.mxu0 0
    %1034 = vmatprep.subr.bf16.mxu0 0
    %1035 = vmatpush1.bf16.msra.mxu0 0
    %1036 = vmatprep.subr.bf16.mxu0 0
    %1037 = vmatpush1.bf16.msra.mxu0 0
    %1038 = vmatprep.subr.bf16.mxu0 0
    %1039 = vmatpush1.bf16.msra.mxu0 %v1023
    %1040 = vmatprep.subr.bf16.mxu0 0
    %1041 = vmatpush2.bf16.msra.mxu0 0
    %1042 = vmatprep.subr.bf16.mxu0 0
    %1043 = vmatpush2.bf16.msra.mxu0 0
    %1044 = vmatprep.subr.bf16.mxu0 0
    %1045 = vmatpush2.bf16.msra.mxu0 0
    %1046 = vmatprep.subr.bf16.mxu0 0
    %1047 = vmatpush2.bf16.msra.mxu0 0
    %1048 = vmatprep.subr.bf16.mxu0 0
    %1049 = vmatpush2.bf16.msra.mxu0 0
    %1050 = vmatprep.subr.bf16.mxu0 0
    %1051 = vmatpush2.bf16.msra.mxu0 0
    %1052 = vmatprep.subr.bf16.mxu0 0
    %1053 = vmatpush2.bf16.msra.mxu0 0
    %1054 = vmatprep.subr.bf16.mxu0 0
    %1055 = vmatpush2.bf16.msra.mxu0 0
    %1056 = vmatprep.mubr.bf16.mxu0 0
    %1057 = vmatmul.mubr.bf16.gmra.mxu0 %v892
    %v1058 = vpop.f32.mrf.mxu0
    %v1059 = vadd.f32 %v889, %v1058
    %v1060 = vpop.f32.mrf.mxu0
    %v1061 = vpop.f32.mrf.mxu0
    %v1062 = vpop.f32.mrf.mxu0
    %1063 = vdwg.mxu0
    %v1064 = vmul.f32 %v1059, 0.5
    %v1065 = vmul.f32 %v1059, 0.70710677
    %vm1066 = vcmp.lt.f32.partialorder %v1065, 0.0
    %v1067 = vsel %vm1066, -1.0, 1.0
    %v1068 = vand.u32 2147483647, %v1065
    %v1069 = vmul.f32 %v1068, 0.3275911
    %v1070 = vadd.f32 %v1069, 1.0
    %v1071 = vrcp.pop %v1070
    %v1072 = vmul.f32 %v1071, 1.0614054
    %v1073 = vadd.f32 %v1072, -1.4531521
    %v1074 = vmul.f32 %v1073, %v1071
    %v1075 = vadd.f32 %v1074, 1.4214138
    %v1076 = vmul.f32 %v1075, %v1071
    %v1077 = vadd.f32 %v1076, -0.28449672
    %v1078 = vmul.f32 %v1077, %v1071
    %v1079 = vadd.f32 %v1078, 0.2548296
    %v1080 = vmul.f32 %v1079, %v1071
    %v1081 = vsub.f32 0.0, %v1068
    %v1082 = vmul.f32 %v1081, %v1068
    %v1083 = vmul.f32 %v1082, 1.442695
    %v1084 = vpow.pop %v1083
    %v1085 = vmul.f32 %v1080, %v1084
    %v1086 = vsub.f32 1.0, %v1085
    %v1087 = vmul.f32 %v1067, %v1086
    %v1088 = vadd.f32 %v1087, 1.0
    %v1089 = vmul.f32 %v1064, %v1088
    %v1090 = vpack.c.bf16 %v1089, %v1089
    %v1092 = vsel %vm310, %v1090, 0
    %1094 = vmatprep.subr.bf16.mxu0 0
    %1095 = vmatpush1.bf16.msra.mxu0 0
    %1096 = vmatprep.subr.bf16.mxu0 0
    %1097 = vmatpush1.bf16.msra.mxu0 0
    %1098 = vmatprep.subr.bf16.mxu0 0
    %1099 = vmatpush1.bf16.msra.mxu0 0
    %1100 = vmatprep.subr.bf16.mxu0 0
    %1101 = vmatpush1.bf16.msra.mxu0 0
    %1102 = vmatprep.subr.bf16.mxu0 0
    %1103 = vmatpush1.bf16.msra.mxu0 0
    %1104 = vmatprep.subr.bf16.mxu0 0
    %1105 = vmatpush1.bf16.msra.mxu0 0
    %1106 = vmatprep.subr.bf16.mxu0 0
    %1107 = vmatpush1.bf16.msra.mxu0 0
    %1108 = vmatprep.subr.bf16.mxu0 0
    %1109 = vmatpush1.bf16.msra.mxu0 %v1092
    %1110 = vmatprep.subr.bf16.mxu0 0
    %1111 = vmatpush2.bf16.msra.mxu0 0
    %1112 = vmatprep.subr.bf16.mxu0 0
    %1113 = vmatpush2.bf16.msra.mxu0 0
    %1114 = vmatprep.subr.bf16.mxu0 0
    %1115 = vmatpush2.bf16.msra.mxu0 0
    %1116 = vmatprep.subr.bf16.mxu0 0
    %1117 = vmatpush2.bf16.msra.mxu0 0
    %1118 = vmatprep.subr.bf16.mxu0 0
    %1119 = vmatpush2.bf16.msra.mxu0 0
    %1120 = vmatprep.subr.bf16.mxu0 0
    %1121 = vmatpush2.bf16.msra.mxu0 0
    %1122 = vmatprep.subr.bf16.mxu0 0
    %1123 = vmatpush2.bf16.msra.mxu0 0
    %1124 = vmatprep.subr.bf16.mxu0 0
    %1125 = vmatpush2.bf16.msra.mxu0 0
    %1126 = vmatprep.mubr.bf16.mxu0 0
    %1127 = vmatmul.mubr.bf16.gmra.mxu0 %v977
    %v1128 = vpop.f32.mrf.mxu0
    %v1129 = vadd.f32 %v964, %v1128
    %v1130 = vpop.f32.mrf.mxu0
    %v1131 = vpop.f32.mrf.mxu0
    %v1132 = vadd.f32 %v969, %v1131
    %v1133 = vpop.f32.mrf.mxu0
    %1134 = vdwg.mxu0
    %v1135 = vmul.f32 %v1017, 2.0
    %v1136 = vmul.f32 %v1020, 2.0
    %v1137 = vmul.f32 %v1129, 2.0
    %v1138 = vmul.f32 %v1132, 2.0
    %v1139 = vadd.f32 %v801, %v1135
    %v1140 = vadd.f32 %v802, %v1136
    %v1141 = vadd.f32 %v803, %v1137
    %v1142 = vadd.f32 %v804, %v1138
    %v1143 = vld [vmem:[%s9 + $0x9] sm:$0x1]
    %v1144 = vld [vmem:[%s9 + $0xa] sm:$0x1]
    %v1145 = vsel %vm138, %v1139, 0.0
    %1146 = vadd.xlane.f32.xlu0 %v1145
    %v1147 = vpop.xlane.xlu0 %1146
    %v1148 = vsel %vm138, %v1140, 0.0
    %1149 = vadd.xlane.f32.xlu0 %v1148
    %v1150 = vpop.xlane.xlu0 %1149
    %v1151 = vsel %vm138, %v1141, 0.0
    %1152 = vadd.xlane.f32.xlu0 %v1151
    %v1153 = vpop.xlane.xlu0 %1152
    %v1154 = vsel %vm138, %v1142, 0.0
    %1155 = vadd.xlane.f32.xlu0 %v1154
    %v1156 = vpop.xlane.xlu0 %1155
    %v1157 = vmul.f32 %v1147, %v151
    %v1158 = vmul.f32 %v1150, %v151
    %v1159 = vmul.f32 %v1153, %v151
    %v1160 = vmul.f32 %v1156, %v151
    %v1161 = vsub.f32 %v1139, %v1157
    %v1162 = vsub.f32 %v1140, %v1158
    %v1163 = vsub.f32 %v1141, %v1159
    %v1164 = vsub.f32 %v1142, %v1160
    %v1165 = vmul.f32 %v1161, %v1161
    %v1166 = vmul.f32 %v1162, %v1162
    %v1167 = vmul.f32 %v1163, %v1163
    %v1168 = vmul.f32 %v1164, %v1164
    %v1169 = vsel %vm138, %v1165, 0.0
    %1170 = vadd.xlane.f32.xlu0 %v1169
    %v1171 = vpop.xlane.xlu0 %1170
    %v1172 = vsel %vm138, %v1166, 0.0
    %1173 = vadd.xlane.f32.xlu0 %v1172
    %v1174 = vpop.xlane.xlu0 %1173
    %v1175 = vsel %vm138, %v1167, 0.0
    %1176 = vadd.xlane.f32.xlu0 %v1175
    %v1177 = vpop.xlane.xlu0 %1176
    %v1178 = vsel %vm138, %v1168, 0.0
    %1179 = vadd.xlane.f32.xlu0 %v1178
    %v1180 = vpop.xlane.xlu0 %1179
    %v1181 = vmul.f32 %v1171, %v151
    %v1182 = vmul.f32 %v1174, %v151
    %v1183 = vmul.f32 %v1177, %v151
    %v1184 = vmul.f32 %v1180, %v151
    %v1185 = vadd.f32 %v1181, 1e-05
    %v1186 = vadd.f32 %v1182, 1e-05
    %v1187 = vadd.f32 %v1183, 1e-05
    %v1188 = vadd.f32 %v1184, 1e-05
    %v1189 = vrsqrt.pop %v1185
    %v1190 = vrsqrt.pop %v1186
    %v1191 = vrsqrt.pop %v1187
    %v1192 = vrsqrt.pop %v1188
    %v1193 = vmul.f32 %v1161, %v1189
    %v1194 = vmul.f32 %v1162, %v1190
    %v1195 = vmul.f32 %v1163, %v1191
    %v1196 = vmul.f32 %v1164, %v1192
    %v1197 = vlaneseq
    %v1198 = vshrl.u32 %v1197, 7
    %v1199 = vsub.s32 0, %v1198
    %v1200 = vrot.slane %v1143, %v1199
    %v1201 = vmul.f32 %v1193, %v1200
    %v1202 = vmul.f32 %v1194, %v1200
    %v1203 = vmul.f32 %v1195, %v1200
    %v1204 = vmul.f32 %v1196, %v1200
    %v1205 = vlaneseq
    %v1206 = vshrl.u32 %v1205, 7
    %v1207 = vsub.s32 0, %v1206
    %v1208 = vrot.slane %v1144, %v1207
    %v1209 = vadd.f32 %v1201, %v1208
    %v1210 = vadd.f32 %v1202, %v1208
    %v1211 = vadd.f32 %v1203, %v1208
    %v1212 = vadd.f32 %v1204, %v1208
    %s1213 = scalar_lea.vmem %s4, 16
    %v1214 = vld [vmem:[%s1213] sm:$0xf]
    %v1215 = vld [vmem:[%s1213 + $0x4] sm:$0xf]
    %v1216 = vld [vmem:[%s1213 + $0x8] sm:$0xf]
    %v1217 = vld [vmem:[%s1213 + $0xc] sm:$0xf]
    %v1218 = vpack.c.bf16 %v1210, %v1209
    %v1219 = vpack.c.bf16 %v1212, %v1211
    %v1220 = vld [vmem:[%s9 + $0xb] sm:$0x1]
    %v1221 = vlaneseq
    %v1222 = vshrl.u32 %v1221, 7
    %v1223 = vsub.s32 0, %v1222
    %v1224 = vrot.slane %v1220, %v1223
    %v1229 = vunpack.c.l.b16 %v1214
    %v1230 = vunpack.c.l.b16 %v1215
    %v1231 = vunpack.c.l.b16 %v1216
    %v1232 = vunpack.c.l.b16 %v1217
    %v1233 = vpack.c.b16 %v1230, %v1229
    %v1234 = vpack.c.b16 %v1232, %v1231
    %v1238 = vsel %vm138, %v1218, 0
    %v1241 = vsel %vm138, %v1219, 0
    %1243 = vmatprep.subr.bf16.mxu0 0
    %1244 = vmatpush1.bf16.msra.mxu0 0
    %1245 = vmatprep.subr.bf16.mxu0 0
    %1246 = vmatpush1.bf16.msra.mxu0 0
    %1247 = vmatprep.subr.bf16.mxu0 0
    %1248 = vmatpush1.bf16.msra.mxu0 0
    %1249 = vmatprep.subr.bf16.mxu0 0
    %1250 = vmatpush1.bf16.msra.mxu0 0
    %1251 = vmatprep.subr.bf16.mxu0 0
    %1252 = vmatpush1.bf16.msra.mxu0 0
    %1253 = vmatprep.subr.bf16.mxu0 0
    %1254 = vmatpush1.bf16.msra.mxu0 0
    %1255 = vmatprep.subr.bf16.mxu0 0
    %1256 = vmatpush1.bf16.msra.mxu0 %v1234
    %1257 = vmatprep.subr.bf16.mxu0 0
    %1258 = vmatpush1.bf16.msra.mxu0 %v1233
    %1259 = vmatprep.subr.bf16.mxu0 0
    %1260 = vmatpush2.bf16.msra.mxu0 0
    %1261 = vmatprep.subr.bf16.mxu0 0
    %1262 = vmatpush2.bf16.msra.mxu0 0
    %1263 = vmatprep.subr.bf16.mxu0 0
    %1264 = vmatpush2.bf16.msra.mxu0 0
    %1265 = vmatprep.subr.bf16.mxu0 0
    %1266 = vmatpush2.bf16.msra.mxu0 0
    %1267 = vmatprep.subr.bf16.mxu0 0
    %1268 = vmatpush2.bf16.msra.mxu0 0
    %1269 = vmatprep.subr.bf16.mxu0 0
    %1270 = vmatpush2.bf16.msra.mxu0 0
    %1271 = vmatprep.subr.bf16.mxu0 0
    %1272 = vmatpush2.bf16.msra.mxu0 0
    %1273 = vmatprep.subr.bf16.mxu0 0
    %1274 = vmatpush2.bf16.msra.mxu0 0
    %1275 = vmatprep.mubr.bf16.mxu0 0
    %1276 = vmatmul.mubr.bf16.gmra.mxu0 %v1238
    %v1277 = vpop.f32.mrf.mxu0
    %v1278 = vadd.f32 %v1224, %v1277
    %v1279 = vpop.f32.mrf.mxu0
    %v1280 = vpop.f32.mrf.mxu0
    %v1281 = vadd.f32 %v1224, %v1280
    %v1282 = vpop.f32.mrf.mxu0
    %1283 = vmatprep.mubr.bf16.mxu0 0
    %1284 = vmatmul.mubr.bf16.gmra.mxu0 %v1241
    %v1285 = vpop.f32.mrf.mxu0
    %v1286 = vadd.f32 %v1224, %v1285
    %v1287 = vpop.f32.mrf.mxu0
    %v1288 = vpop.f32.mrf.mxu0
    %v1289 = vadd.f32 %v1224, %v1288
    %v1290 = vpop.f32.mrf.mxu0
    %1291 = vdwg.mxu0
    %v1292 = vmul.f32 %v1278, 0.5
    %v1293 = vmul.f32 %v1281, 0.5
    %v1294 = vmul.f32 %v1286, 0.5
    %v1295 = vmul.f32 %v1289, 0.5
    %v1296 = vmul.f32 %v1278, 0.70710677
    %v1297 = vmul.f32 %v1281, 0.70710677
    %v1298 = vmul.f32 %v1286, 0.70710677
    %v1299 = vmul.f32 %v1289, 0.70710677
    %vm1300 = vcmp.lt.f32.partialorder %v1296, 0.0
    %vm1301 = vcmp.lt.f32.partialorder %v1297, 0.0
    %vm1302 = vcmp.lt.f32.partialorder %v1298, 0.0
    %vm1303 = vcmp.lt.f32.partialorder %v1299, 0.0
    %v1304 = vsel %vm1300, -1.0, 1.0
    %v1305 = vsel %vm1301, -1.0, 1.0
    %v1306 = vsel %vm1302, -1.0, 1.0
    %v1307 = vsel %vm1303, -1.0, 1.0
    %v1308 = vand.u32 2147483647, %v1296
    %v1309 = vand.u32 2147483647, %v1297
    %v1310 = vand.u32 2147483647, %v1298
    %v1311 = vand.u32 2147483647, %v1299
    %v1312 = vmul.f32 %v1308, 0.3275911
    %v1313 = vmul.f32 %v1309, 0.3275911
    %v1314 = vmul.f32 %v1310, 0.3275911
    %v1315 = vmul.f32 %v1311, 0.3275911
    %v1316 = vadd.f32 %v1312, 1.0
    %v1317 = vadd.f32 %v1313, 1.0
    %v1318 = vadd.f32 %v1314, 1.0
    %v1319 = vadd.f32 %v1315, 1.0
    %v1320 = vrcp.pop %v1316
    %v1321 = vrcp.pop %v1317
    %v1322 = vrcp.pop %v1318
    %v1323 = vrcp.pop %v1319
    %v1324 = vmul.f32 %v1320, 1.0614054
    %v1325 = vmul.f32 %v1321, 1.0614054
    %v1326 = vmul.f32 %v1322, 1.0614054
    %v1327 = vmul.f32 %v1323, 1.0614054
    %v1328 = vadd.f32 %v1324, -1.4531521
    %v1329 = vadd.f32 %v1325, -1.4531521
    %v1330 = vadd.f32 %v1326, -1.4531521
    %v1331 = vadd.f32 %v1327, -1.4531521
    %v1332 = vmul.f32 %v1328, %v1320
    %v1333 = vmul.f32 %v1329, %v1321
    %v1334 = vmul.f32 %v1330, %v1322
    %v1335 = vmul.f32 %v1331, %v1323
    %v1336 = vadd.f32 %v1332, 1.4214138
    %v1337 = vadd.f32 %v1333, 1.4214138
    %v1338 = vadd.f32 %v1334, 1.4214138
    %v1339 = vadd.f32 %v1335, 1.4214138
    %v1340 = vmul.f32 %v1336, %v1320
    %v1341 = vmul.f32 %v1337, %v1321
    %v1342 = vmul.f32 %v1338, %v1322
    %v1343 = vmul.f32 %v1339, %v1323
    %v1344 = vadd.f32 %v1340, -0.28449672
    %v1345 = vadd.f32 %v1341, -0.28449672
    %v1346 = vadd.f32 %v1342, -0.28449672
    %v1347 = vadd.f32 %v1343, -0.28449672
    %v1348 = vmul.f32 %v1344, %v1320
    %v1349 = vmul.f32 %v1345, %v1321
    %v1350 = vmul.f32 %v1346, %v1322
    %v1351 = vmul.f32 %v1347, %v1323
    %v1352 = vadd.f32 %v1348, 0.2548296
    %v1353 = vadd.f32 %v1349, 0.2548296
    %v1354 = vadd.f32 %v1350, 0.2548296
    %v1355 = vadd.f32 %v1351, 0.2548296
    %v1356 = vmul.f32 %v1352, %v1320
    %v1357 = vmul.f32 %v1353, %v1321
    %v1358 = vmul.f32 %v1354, %v1322
    %v1359 = vmul.f32 %v1355, %v1323
    %v1360 = vsub.f32 0.0, %v1308
    %v1361 = vsub.f32 0.0, %v1309
    %v1362 = vsub.f32 0.0, %v1310
    %v1363 = vsub.f32 0.0, %v1311
    %v1364 = vmul.f32 %v1360, %v1308
    %v1365 = vmul.f32 %v1361, %v1309
    %v1366 = vmul.f32 %v1362, %v1310
    %v1367 = vmul.f32 %v1363, %v1311
    %v1368 = vmul.f32 %v1364, 1.442695
    %v1369 = vpow.pop %v1368
    %v1370 = vmul.f32 %v1365, 1.442695
    %v1371 = vpow.pop %v1370
    %v1372 = vmul.f32 %v1366, 1.442695
    %v1373 = vpow.pop %v1372
    %v1374 = vmul.f32 %v1367, 1.442695
    %v1375 = vpow.pop %v1374
    %v1376 = vmul.f32 %v1356, %v1369
    %v1377 = vmul.f32 %v1357, %v1371
    %v1378 = vmul.f32 %v1358, %v1373
    %v1379 = vmul.f32 %v1359, %v1375
    %v1380 = vsub.f32 1.0, %v1376
    %v1381 = vsub.f32 1.0, %v1377
    %v1382 = vsub.f32 1.0, %v1378
    %v1383 = vsub.f32 1.0, %v1379
    %v1384 = vmul.f32 %v1304, %v1380
    %v1385 = vmul.f32 %v1305, %v1381
    %v1386 = vmul.f32 %v1306, %v1382
    %v1387 = vmul.f32 %v1307, %v1383
    %v1388 = vadd.f32 %v1384, 1.0
    %v1389 = vadd.f32 %v1385, 1.0
    %v1390 = vadd.f32 %v1386, 1.0
    %v1391 = vadd.f32 %v1387, 1.0
    %v1392 = vmul.f32 %v1292, %v1388
    %v1393 = vmul.f32 %v1293, %v1389
    %v1394 = vmul.f32 %v1294, %v1390
    %v1395 = vmul.f32 %v1295, %v1391
    %s1396 = scalar_lea.vmem %s5, 8
    %v1397 = vld [vmem:[%s1396] sm:$0xf]
    %v1398 = vld [vmem:[%s1396 + $0x4] sm:$0xf]
    %v1399 = vpack.c.bf16 %v1393, %v1392
    %v1400 = vpack.c.bf16 %v1395, %v1394
    %v1401 = vld [vmem:[%s9 + $0xc] sm:$0x1]
    %v1402 = vlaneseq
    %v1403 = vshrl.u32 %v1402, 7
    %v1404 = vsub.s32 0, %v1403
    %v1405 = vrot.slane %v1401, %v1404
    %v1408 = vunpack.c.l.b16 %v1397
    %v1409 = vunpack.c.l.b16 %v1398
    %v1410 = vpack.c.b16 %v1409, %v1408
    %v1413 = vsel %vm220, %v1399, 0
    %v1416 = vsel %vm220, %v1400, 0
    %1418 = vmatprep.subr.bf16.mxu0 0
    %1419 = vmatpush1.bf16.msra.mxu0 0
    %1420 = vmatprep.subr.bf16.mxu0 0
    %1421 = vmatpush1.bf16.msra.mxu0 0
    %1422 = vmatprep.subr.bf16.mxu0 0
    %1423 = vmatpush1.bf16.msra.mxu0 0
    %1424 = vmatprep.subr.bf16.mxu0 0
    %1425 = vmatpush1.bf16.msra.mxu0 0
    %1426 = vmatprep.subr.bf16.mxu0 0
    %1427 = vmatpush1.bf16.msra.mxu0 0
    %1428 = vmatprep.subr.bf16.mxu0 0
    %1429 = vmatpush1.bf16.msra.mxu0 0
    %1430 = vmatprep.subr.bf16.mxu0 0
    %1431 = vmatpush1.bf16.msra.mxu0 0
    %1432 = vmatprep.subr.bf16.mxu0 0
    %1433 = vmatpush1.bf16.msra.mxu0 %v1410
    %1434 = vmatprep.subr.bf16.mxu0 0
    %1435 = vmatpush2.bf16.msra.mxu0 0
    %1436 = vmatprep.subr.bf16.mxu0 0
    %1437 = vmatpush2.bf16.msra.mxu0 0
    %1438 = vmatprep.subr.bf16.mxu0 0
    %1439 = vmatpush2.bf16.msra.mxu0 0
    %1440 = vmatprep.subr.bf16.mxu0 0
    %1441 = vmatpush2.bf16.msra.mxu0 0
    %1442 = vmatprep.subr.bf16.mxu0 0
    %1443 = vmatpush2.bf16.msra.mxu0 0
    %1444 = vmatprep.subr.bf16.mxu0 0
    %1445 = vmatpush2.bf16.msra.mxu0 0
    %1446 = vmatprep.subr.bf16.mxu0 0
    %1447 = vmatpush2.bf16.msra.mxu0 0
    %1448 = vmatprep.subr.bf16.mxu0 0
    %1449 = vmatpush2.bf16.msra.mxu0 0
    %1450 = vmatprep.mubr.bf16.mxu0 0
    %1451 = vmatmul.mubr.bf16.gmra.mxu0 %v1413
    %v1452 = vpop.f32.mrf.mxu0
    %v1453 = vadd.f32 %v1405, %v1452
    %v1454 = vpop.f32.mrf.mxu0
    %v1455 = vpop.f32.mrf.mxu0
    %v1456 = vadd.f32 %v1405, %v1455
    %v1457 = vpop.f32.mrf.mxu0
    %1458 = vmatprep.mubr.bf16.mxu0 0
    %1459 = vmatmul.mubr.bf16.gmra.mxu0 %v1416
    %v1460 = vpop.f32.mrf.mxu0
    %v1461 = vadd.f32 %v1405, %v1460
    %v1462 = vpop.f32.mrf.mxu0
    %v1463 = vpop.f32.mrf.mxu0
    %v1464 = vadd.f32 %v1405, %v1463
    %v1465 = vpop.f32.mrf.mxu0
    %1466 = vdwg.mxu0
    %v1467 = vmul.f32 %v1453, 2.0
    %v1468 = vmul.f32 %v1456, 2.0
    %v1469 = vmul.f32 %v1461, 2.0
    %v1470 = vmul.f32 %v1464, 2.0
    %v1471 = vadd.f32 %v1139, %v1467
    %v1472 = vadd.f32 %v1140, %v1468
    %v1473 = vadd.f32 %v1141, %v1469
    %v1474 = vadd.f32 %v1142, %v1470
    %v1475 = vld [vmem:[%s9 + $0xd] sm:$0x1]
    %v1476 = vld [vmem:[%s9 + $0xe] sm:$0x1]
    %v1477 = vsel %vm138, %v1471, 0.0
    %1478 = vadd.xlane.f32.xlu0 %v1477
    %v1479 = vpop.xlane.xlu0 %1478
    %v1480 = vsel %vm138, %v1472, 0.0
    %1481 = vadd.xlane.f32.xlu0 %v1480
    %v1482 = vpop.xlane.xlu0 %1481
    %v1483 = vsel %vm138, %v1473, 0.0
    %1484 = vadd.xlane.f32.xlu0 %v1483
    %v1485 = vpop.xlane.xlu0 %1484
    %v1486 = vsel %vm138, %v1474, 0.0
    %1487 = vadd.xlane.f32.xlu0 %v1486
    %v1488 = vpop.xlane.xlu0 %1487
    %v1489 = vmul.f32 %v1479, %v151
    %v1490 = vmul.f32 %v1482, %v151
    %v1491 = vmul.f32 %v1485, %v151
    %v1492 = vmul.f32 %v1488, %v151
    %v1493 = vsub.f32 %v1471, %v1489
    %v1494 = vsub.f32 %v1472, %v1490
    %v1495 = vsub.f32 %v1473, %v1491
    %v1496 = vsub.f32 %v1474, %v1492
    %v1497 = vmul.f32 %v1493, %v1493
    %v1498 = vmul.f32 %v1494, %v1494
    %v1499 = vmul.f32 %v1495, %v1495
    %v1500 = vmul.f32 %v1496, %v1496
    %v1501 = vsel %vm138, %v1497, 0.0
    %1502 = vadd.xlane.f32.xlu0 %v1501
    %v1503 = vpop.xlane.xlu0 %1502
    %v1504 = vsel %vm138, %v1498, 0.0
    %1505 = vadd.xlane.f32.xlu0 %v1504
    %v1506 = vpop.xlane.xlu0 %1505
    %v1507 = vsel %vm138, %v1499, 0.0
    %1508 = vadd.xlane.f32.xlu0 %v1507
    %v1509 = vpop.xlane.xlu0 %1508
    %v1510 = vsel %vm138, %v1500, 0.0
    %1511 = vadd.xlane.f32.xlu0 %v1510
    %v1512 = vpop.xlane.xlu0 %1511
    %v1513 = vmul.f32 %v1503, %v151
    %v1514 = vmul.f32 %v1506, %v151
    %v1515 = vmul.f32 %v1509, %v151
    %v1516 = vmul.f32 %v1512, %v151
    %v1517 = vadd.f32 %v1513, 1e-05
    %v1518 = vadd.f32 %v1514, 1e-05
    %v1519 = vadd.f32 %v1515, 1e-05
    %v1520 = vadd.f32 %v1516, 1e-05
    %v1521 = vrsqrt.pop %v1517
    %v1522 = vrsqrt.pop %v1518
    %v1523 = vrsqrt.pop %v1519
    %v1524 = vrsqrt.pop %v1520
    %v1525 = vmul.f32 %v1493, %v1521
    %v1526 = vmul.f32 %v1494, %v1522
    %v1527 = vmul.f32 %v1495, %v1523
    %v1528 = vmul.f32 %v1496, %v1524
    %v1529 = vlaneseq
    %v1530 = vshrl.u32 %v1529, 7
    %v1531 = vsub.s32 0, %v1530
    %v1532 = vrot.slane %v1475, %v1531
    %v1533 = vmul.f32 %v1525, %v1532
    %v1534 = vmul.f32 %v1526, %v1532
    %v1535 = vmul.f32 %v1527, %v1532
    %v1536 = vmul.f32 %v1528, %v1532
    %v1537 = vlaneseq
    %v1538 = vshrl.u32 %v1537, 7
    %v1539 = vsub.s32 0, %v1538
    %v1540 = vrot.slane %v1476, %v1539
    %v1541 = vadd.f32 %v1533, %v1540
    %v1542 = vadd.f32 %v1534, %v1540
    %v1543 = vadd.f32 %v1535, %v1540
    %v1544 = vadd.f32 %v1536, %v1540
    %v1545 = vsel %vm138, %v1541, 0.0
    %v1546 = vsel %vm138, %v1542, 0.0
    %v1547 = vadd.f32 %v1545, %v1546
    %v1548 = vrot.slane %v1547, 4
    %v1549 = vadd.f32 %v1547, %v1548
    %v1550 = vrot.slane %v1549, 2
    %v1551 = vadd.f32 %v1549, %v1550
    %v1552 = vrot.slane %v1551, 1
    %v1553 = vadd.f32 %v1551, %v1552
    %v1554 = vrcp.pop 16.0
    %v1555 = vmul.f32 %v1553, %v1554
    %v1556 = vsel %vm138, %v1543, 0.0
    %v1557 = vsel %vm138, %v1544, 0.0
    %v1558 = vadd.f32 %v1556, %v1557
    %v1559 = vrot.slane %v1558, 4
    %v1560 = vadd.f32 %v1558, %v1559
    %v1561 = vrot.slane %v1560, 2
    %v1562 = vadd.f32 %v1560, %v1561
    %v1563 = vrot.slane %v1562, 1
    %v1564 = vadd.f32 %v1562, %v1563
    %v1565 = vmul.f32 %v1564, %v1554
    %vm1566 = vcmask 1040384
    %v1567 = vsel %vm1566, %v1555, %v1565
    %v1568 = vld [vmem:[%s6] sm:$0xf]
    %v1569 = vld [vmem:[%s6 + $0x4] sm:$0xf]
    %v1570 = vld [vmem:[%s6 + $0x8] sm:$0xf]
    %v1571 = vld [vmem:[%s6 + $0xc] sm:$0xf]
    %v1572 = vpack.c.bf16 %v1567, %v1567
    %v1573 = vld [vmem:[%s9 + $0xf] sm:$0x1]
    %v1574 = vlaneseq
    %v1575 = vshrl.u32 %v1574, 7
    %v1576 = vsub.s32 0, %v1575
    %v1577 = vrot.slane %v1573, %v1576
    %v1582 = vunpack.c.l.b16 %v1568
    %v1583 = vunpack.c.l.b16 %v1569
    %v1584 = vunpack.c.l.b16 %v1570
    %v1585 = vunpack.c.l.b16 %v1571
    %v1586 = vpack.c.b16 %v1583, %v1582
    %v1587 = vpack.c.b16 %v1585, %v1584
    %v1591 = vsel %vm138, %v1572, 0
    %1593 = vmatprep.subr.bf16.mxu0 0
    %1594 = vmatpush1.bf16.msra.mxu0 0
    %1595 = vmatprep.subr.bf16.mxu0 0
    %1596 = vmatpush1.bf16.msra.mxu0 0
    %1597 = vmatprep.subr.bf16.mxu0 0
    %1598 = vmatpush1.bf16.msra.mxu0 0
    %1599 = vmatprep.subr.bf16.mxu0 0
    %1600 = vmatpush1.bf16.msra.mxu0 0
    %1601 = vmatprep.subr.bf16.mxu0 0
    %1602 = vmatpush1.bf16.msra.mxu0 0
    %1603 = vmatprep.subr.bf16.mxu0 0
    %1604 = vmatpush1.bf16.msra.mxu0 0
    %1605 = vmatprep.subr.bf16.mxu0 0
    %1606 = vmatpush1.bf16.msra.mxu0 %v1587
    %1607 = vmatprep.subr.bf16.mxu0 0
    %1608 = vmatpush1.bf16.msra.mxu0 %v1586
    %1609 = vmatprep.subr.bf16.mxu0 0
    %1610 = vmatpush2.bf16.msra.mxu0 0
    %1611 = vmatprep.subr.bf16.mxu0 0
    %1612 = vmatpush2.bf16.msra.mxu0 0
    %1613 = vmatprep.subr.bf16.mxu0 0
    %1614 = vmatpush2.bf16.msra.mxu0 0
    %1615 = vmatprep.subr.bf16.mxu0 0
    %1616 = vmatpush2.bf16.msra.mxu0 0
    %1617 = vmatprep.subr.bf16.mxu0 0
    %1618 = vmatpush2.bf16.msra.mxu0 0
    %1619 = vmatprep.subr.bf16.mxu0 0
    %1620 = vmatpush2.bf16.msra.mxu0 0
    %1621 = vmatprep.subr.bf16.mxu0 0
    %1622 = vmatpush2.bf16.msra.mxu0 0
    %1623 = vmatprep.subr.bf16.mxu0 0
    %1624 = vmatpush2.bf16.msra.mxu0 0
    %1625 = vmatprep.mubr.bf16.mxu0 0
    %1626 = vmatmul.mubr.bf16.gmra.mxu0 %v1591
    %v1627 = vpop.f32.mrf.mxu0
    %v1628 = vadd.f32 %v1577, %v1627
    %v1629 = vpop.f32.mrf.mxu0
    %v1630 = vpop.f32.mrf.mxu0
    %v1631 = vpop.f32.mrf.mxu0
    %1632 = vdwg.mxu0
    %1633 = vst [vmem:[#allocation2] sm:$0x3] %v1628
    // Predicated region
    $region42: #{tpu_custom_call.1} parent=1 // pred_check
      _
    $region43: #{tpu_custom_call.1} parent=1 // pred_check_branch
      %1635 = sbr.rel (0) target = $region45
    $region44: #{tpu_custom_call.1} parent=1 // pred_region
      %s1637 = ssub.s32 32, 32
      %1638 = vsyncadd [#allocation3], %s1637
      %s1640 = sshll.u32 [#allocation2], 4
      %s1641 = int_to_ptr.vmem [resolvable:$true] %s1640
      %1643 = dma.vmem_to_hbm [thread:$0]  %s1641, 32, %s10, [#allocation3]
    $region45: #{tpu_custom_call.1} parent=1 // pred_fallthru
      _
    // Predicated region
    $region46: #{tpu_custom_call.1} parent=1 // pred_check
      _
    $region47: #{tpu_custom_call.1} parent=1 // pred_check_branch
      %1645 = sbr.rel (0) target = $region49
    $region48: #{tpu_custom_call.1} parent=1 // pred_region
      %1646 = dma.done [#allocation3], 32
    $region49: #{tpu_custom_call.1} parent=1 // pred_fallthru
      _
    %1647 = vsyncpa [#allocation3], 1

</llo_original>
